<compile_context>
chip_gen: v6e
topology: v6e:2x2x1
jax: 0.10.0
libtpu: 0.0.40
codegen_flags: <defaults>
</compile_context>

<pallas_src>
import functools

import jax
import jax.numpy as jnp
from jax.experimental import pallas as pl
from jax.experimental.pallas import tpu as pltpu


# ----------------------------------------------------------------------------
# Fused Pallas kernel: all LSTM layers + full time recurrence in one body.
# refs = (x_ref, [w_ih_ref, w_hh_ref, b_ref] * n_layers,   <- inputs
#         h_out_ref, c_out_ref,                            <- outputs
#         act_ref)                                         <- VMEM scratch
# ----------------------------------------------------------------------------
def _encoder_lstm_kernel(n_layers, seq_len, *refs):
    x_ref = refs[0]
    w_refs = refs[1:1 + 3 * n_layers]
    h_out_ref = refs[1 + 3 * n_layers]
    c_out_ref = refs[2 + 3 * n_layers]
    act_ref = refs[3 + 3 * n_layers]          # (T, Bp, H) inter-layer buffer

    for l in range(n_layers):                 # static unroll over layers
        w_ih = w_refs[3 * l][...]             # (in_dim, 4H)
        w_hh = w_refs[3 * l + 1][...]         # (H, 4H)
        b = w_refs[3 * l + 2][...]            # (1, 4H)
        H = w_hh.shape[0]

        # Layer input: embedded tokens for layer 0, previous layer's outputs
        # (VMEM-resident scratch) for deeper layers.
        x = x_ref[...] if l == 0 else act_ref[...]
        tb, bp, in_dim = x.shape

        # Hoisted input projection: one big MXU matmul covering all T steps,
        # outside the serial dependence chain.
        xg = (jnp.dot(x.reshape(tb * bp, in_dim), w_ih,
                      preferred_element_type=jnp.float32) + b
              ).reshape(tb, bp, 4 * H)

        h = jnp.zeros((bp, H), jnp.float32)
        c = jnp.zeros((bp, H), jnp.float32)
        for t in range(seq_len):              # static unroll over time
            gates = xg[t] + jnp.dot(h, w_hh,
                                    preferred_element_type=jnp.float32)
            # PyTorch gate order: i, f, g, o
            i_g = jax.nn.sigmoid(gates[:, 0 * H:1 * H])
            f_g = jax.nn.sigmoid(gates[:, 1 * H:2 * H])
            g_g = jnp.tanh(gates[:, 2 * H:3 * H])
            o_g = jax.nn.sigmoid(gates[:, 3 * H:4 * H])
            c = f_g * c + i_g * g_g
            h = o_g * jnp.tanh(c)
            if l + 1 < n_layers:
                act_ref[t] = h                # feed next layer (stays in VMEM)

        h_out_ref[l] = h.astype(h_out_ref.dtype)
        c_out_ref[l] = c.astype(c_out_ref.dtype)


def encoder_lstm(x_tbe, lstm_params):
    """Fused multi-layer LSTM.

    x_tbe:       (T, Bp, E) float32, batch already padded to a multiple of 8.
    lstm_params: list of (w_ih_t (in_dim,4H), w_hh_t (H,4H), bias (1,4H)).
    returns:     hidden (n_layers, Bp, H), cell (n_layers, Bp, H)
    """
    T, Bp, E = x_tbe.shape
    n_layers = len(lstm_params)
    H = lstm_params[0][1].shape[0]

    flat_args = [x_tbe]
    in_specs = [pl.BlockSpec((T, Bp, E), lambda i: (0, 0, 0))]
    for (w_ih_t, w_hh_t, bias) in lstm_params:
        flat_args += [w_ih_t, w_hh_t, bias]
        in_specs += [
            pl.BlockSpec(w_ih_t.shape, lambda i: (0, 0)),
            pl.BlockSpec(w_hh_t.shape, lambda i: (0, 0)),
            pl.BlockSpec(bias.shape, lambda i: (0, 0)),
        ]

    out_specs = [
        pl.BlockSpec((n_layers, Bp, H), lambda i: (0, 0, 0)),
        pl.BlockSpec((n_layers, Bp, H), lambda i: (0, 0, 0)),
    ]
    out_shape = (
        jax.ShapeDtypeStruct((n_layers, Bp, H), jnp.float32),
        jax.ShapeDtypeStruct((n_layers, Bp, H), jnp.float32),
    )

    kernel = functools.partial(_encoder_lstm_kernel, n_layers, T)
    return pl.pallas_call(
        kernel,
        out_shape=out_shape,
        grid_spec=pltpu.PrefetchScalarGridSpec(
            num_scalar_prefetch=0,
            grid=(1,),                          # single invocation; whole
            in_specs=in_specs,                  # problem is VMEM-resident
            out_specs=out_specs,
            scratch_shapes=[pltpu.VMEM((T, Bp, H), jnp.float32)],
        ),
        compiler_params=pltpu.CompilerParams(
            dimension_semantics=("arbitrary",)),
    )(*flat_args)


# ----------------------------------------------------------------------------
# Encoder forward (embedding gather in plain JAX; recurrence in Pallas).
# ----------------------------------------------------------------------------
@functools.partial(jax.jit, static_argnames=("n_layers",))
def encoder_forward(src, params, n_layers):
    """src: (B, T) int32 token ids. Returns (hidden, cell): (n_layers, B, H)."""
    B, T = src.shape
    emb_table = params["embedding"]                     # (vocab, E)
    embedded = jnp.take(emb_table, src, axis=0)         # (B, T, E)
    # TODO(synk): nn.Dropout is stochastic at train time; eval semantics -> identity.
    x = jnp.transpose(embedded, (1, 0, 2)).astype(jnp.float32)   # (T, B, E)

    # Pad batch to the f32 sublane tile (8): full vregs / MXU row groups.
    Bp = ((B + 7) // 8) * 8
    if Bp != B:
        x = jnp.pad(x, ((0, 0), (0, Bp - B), (0, 0)))

    hidden_p, cell_p = encoder_lstm(x, params["lstm"])
    return hidden_p[:, :B, :], cell_p[:, :B, :]


def init_params(key, input_dim, emb_dim, hid_dim, n_layers):
    k_emb, k_lstm = jax.random.split(key)
    params = {}
    params["embedding"] = jax.random.normal(k_emb, (input_dim, emb_dim),
                                            dtype=jnp.float32)
    bound = 1.0 / (hid_dim ** 0.5)
    lstm_params = []
    keys = jax.random.split(k_lstm, n_layers * 4)
    for l in range(n_layers):
        in_dim = emb_dim if l == 0 else hid_dim
        k0, k1, k2, k3 = keys[4 * l:4 * l + 4]
        w_ih = jax.random.uniform(k0, (4 * hid_dim, in_dim),
                                  minval=-bound, maxval=bound, dtype=jnp.float32)
        w_hh = jax.random.uniform(k1, (4 * hid_dim, hid_dim),
                                  minval=-bound, maxval=bound, dtype=jnp.float32)
        b_ih = jax.random.uniform(k2, (4 * hid_dim,),
                                  minval=-bound, maxval=bound, dtype=jnp.float32)
        b_hh = jax.random.uniform(k3, (4 * hid_dim,),
                                  minval=-bound, maxval=bound, dtype=jnp.float32)
        # Pre-transposed layout: (in_dim, 4H) / (H, 4H), fused bias (1, 4H).
        lstm_params.append((w_ih.T, w_hh.T, (b_ih + b_hh)[None, :]))
    params["lstm"] = lstm_params
    return params


# ----------------------------------------------------------------------------
# Pure-JAX reference (for correctness check).
# ----------------------------------------------------------------------------
def encoder_reference(src, params, n_layers):
    emb = jnp.take(params["embedding"], src, axis=0)    # (B, T, E)
    x = jnp.transpose(emb, (1, 0, 2))                    # (T, B, E)
    hs, cs = [], []
    for l in range(n_layers):
        w_ih_t, w_hh_t, bias = params["lstm"][l]
        H = w_hh_t.shape[0]
        B = x.shape[1]
        h = jnp.zeros((B, H), jnp.float32)
        c = jnp.zeros((B, H), jnp.float32)
        outs = []
        for t in range(x.shape[0]):
            gates = x[t] @ w_ih_t + h @ w_hh_t + bias
            i_g = jax.nn.sigmoid(gates[:, 0 * H:1 * H])
            f_g = jax.nn.sigmoid(gates[:, 1 * H:2 * H])
            g_g = jnp.tanh(gates[:, 2 * H:3 * H])
            o_g = jax.nn.sigmoid(gates[:, 3 * H:4 * H])
            c = f_g * c + i_g * g_g
            h = o_g * jnp.tanh(c)
            outs.append(h)
        x = jnp.stack(outs, axis=0)
        hs.append(h)
        cs.append(c)
    return jnp.stack(hs, 0), jnp.stack(cs, 0)


if __name__ == "__main__":
    INPUT_DIM = 50      # vocab size
    EMB_DIM = 32
    HID_DIM = 32
    N_LAYERS = 2
    BATCH = 2
    SEQ = 8

    key = jax.random.PRNGKey(0)
    k_p, k_src = jax.random.split(key)
    params = init_params(k_p, INPUT_DIM, EMB_DIM, HID_DIM, N_LAYERS)
    src = jax.random.randint(k_src, (BATCH, SEQ), 0, INPUT_DIM, dtype=jnp.int32)

    hidden, cell = encoder_forward(src, params, N_LAYERS)
    jax.block_until_ready((hidden, cell))

    h_ref, c_ref = encoder_reference(src, params, N_LAYERS)
    assert hidden.shape == (N_LAYERS, BATCH, HID_DIM)
    assert cell.shape == (N_LAYERS, BATCH, HID_DIM)
    assert jnp.allclose(hidden, h_ref, atol=1e-4, rtol=1e-4)
    assert jnp.allclose(cell, c_ref, atol=1e-4, rtol=1e-4)

    print("KERNEL_OK")
</pallas_src>

<mosaic_0001>
module attributes {stable_mosaic.version = 11 : i64} {
  func.func @_encoder_lstm_kernel(%arg0: i32, %arg1: memref<8x8x32xf32, #tpu.memory_space<vmem>>, %arg2: memref<32x128xf32, #tpu.memory_space<vmem>>, %arg3: memref<32x128xf32, #tpu.memory_space<vmem>>, %arg4: memref<1x128xf32, #tpu.memory_space<vmem>>, %arg5: memref<32x128xf32, #tpu.memory_space<vmem>>, %arg6: memref<32x128xf32, #tpu.memory_space<vmem>>, %arg7: memref<1x128xf32, #tpu.memory_space<vmem>>, %arg8: memref<2x8x32xf32, #tpu.memory_space<vmem>>, %arg9: memref<2x8x32xf32, #tpu.memory_space<vmem>>, %arg10: memref<8x8x32xf32, #tpu.memory_space<vmem>>) attributes {dimension_semantics = [#tpu.dimension_semantics<arbitrary>], iteration_bounds = array<i64: 1>, scalar_prefetch = 0 : i64, scratch_operands = 1 : i64, tpu.core_type = #tpu.core_type<tc>, window_params = [{pipeline_mode = #tpu.pipeline_mode<synchronous>, transform_indices = @transform_0, window_bounds = array<i64: 8, 8, 32>}, {pipeline_mode = #tpu.pipeline_mode<synchronous>, transform_indices = @transform_1, window_bounds = array<i64: 32, 128>}, {pipeline_mode = #tpu.pipeline_mode<synchronous>, transform_indices = @transform_2, window_bounds = array<i64: 32, 128>}, {pipeline_mode = #tpu.pipeline_mode<synchronous>, transform_indices = @transform_3, window_bounds = array<i64: 1, 128>}, {pipeline_mode = #tpu.pipeline_mode<synchronous>, transform_indices = @transform_4, window_bounds = array<i64: 32, 128>}, {pipeline_mode = #tpu.pipeline_mode<synchronous>, transform_indices = @transform_5, window_bounds = array<i64: 32, 128>}, {pipeline_mode = #tpu.pipeline_mode<synchronous>, transform_indices = @transform_6, window_bounds = array<i64: 1, 128>}, {pipeline_mode = #tpu.pipeline_mode<synchronous>, transform_indices = @transform_7, window_bounds = array<i64: 2, 8, 32>}, {pipeline_mode = #tpu.pipeline_mode<synchronous>, transform_indices = @transform_8, window_bounds = array<i64: 2, 8, 32>}]} {
    %c0 = arith.constant 0 : index
    %c0_0 = arith.constant 0 : index
    %0 = vector.load %arg2[%c0, %c0_0] : memref<32x128xf32, #tpu.memory_space<vmem>>, vector<32x128xf32>
    %c0_1 = arith.constant 0 : index
    %c0_2 = arith.constant 0 : index
    %1 = vector.load %arg3[%c0_1, %c0_2] : memref<32x128xf32, #tpu.memory_space<vmem>>, vector<32x128xf32>
    %c0_3 = arith.constant 0 : index
    %c0_4 = arith.constant 0 : index
    %2 = vector.load %arg4[%c0_3, %c0_4] : memref<1x128xf32, #tpu.memory_space<vmem>>, vector<1x128xf32>
    %c0_5 = arith.constant 0 : index
    %c0_6 = arith.constant 0 : index
    %c0_7 = arith.constant 0 : index
    %3 = vector.load %arg1[%c0_5, %c0_6, %c0_7] : memref<8x8x32xf32, #tpu.memory_space<vmem>>, vector<8x8x32xf32>
    %4 = vector.shape_cast %3 : vector<8x8x32xf32> to vector<64x32xf32>
    %cst = arith.constant dense<0.000000e+00> : vector<64x128xf32>
    %5 = tpu.matmul %4, %0, %cst {dimension_numbers = #tpu.dot_dimension_numbers<[1], [0], [0], [1], [0, 0, 1, 1], [], []>} : vector<64x32xf32>, vector<32x128xf32>, vector<64x128xf32> -> vector<64x128xf32>
    %6 = vector.broadcast %2 : vector<1x128xf32> to vector<64x128xf32>
    %7 = arith.addf %5, %6 : vector<64x128xf32>
    %8 = vector.shape_cast %7 : vector<64x128xf32> to vector<8x8x128xf32>
    %cst_8 = arith.constant 0.000000e+00 : f32
    %9 = vector.broadcast %cst_8 : f32 to vector<8x32xf32>
    %cst_9 = arith.constant 0.000000e+00 : f32
    %10 = vector.broadcast %cst_9 : f32 to vector<8x32xf32>
    %11 = vector.extract_strided_slice %8 {offsets = [0, 0, 0], sizes = [1, 8, 128], strides = [1, 1, 1]} : vector<8x8x128xf32> to vector<1x8x128xf32>
    %12 = vector.shape_cast %11 : vector<1x8x128xf32> to vector<8x128xf32>
    %cst_10 = arith.constant dense<0.000000e+00> : vector<8x128xf32>
    %13 = tpu.matmul %9, %1, %cst_10 {dimension_numbers = #tpu.dot_dimension_numbers<[1], [0], [0], [1], [0, 0, 1, 1], [], []>} : vector<8x32xf32>, vector<32x128xf32>, vector<8x128xf32> -> vector<8x128xf32>
    %14 = arith.addf %12, %13 : vector<8x128xf32>
    %15 = vector.extract_strided_slice %14 {offsets = [0, 0], sizes = [8, 32], strides = [1, 1]} : vector<8x128xf32> to vector<8x32xf32>
    %16 = arith.negf %15 : vector<8x32xf32>
    %17 = math.exp %16 : vector<8x32xf32>
    %cst_11 = arith.constant 1.000000e+00 : f32
    %18 = vector.broadcast %cst_11 : f32 to vector<8x32xf32>
    %19 = arith.addf %18, %17 : vector<8x32xf32>
    %20 = arith.divf %18, %19 : vector<8x32xf32>
    %21 = vector.extract_strided_slice %14 {offsets = [0, 32], sizes = [8, 32], strides = [1, 1]} : vector<8x128xf32> to vector<8x32xf32>
    %22 = arith.negf %21 : vector<8x32xf32>
    %23 = math.exp %22 : vector<8x32xf32>
    %cst_12 = arith.constant 1.000000e+00 : f32
    %24 = vector.broadcast %cst_12 : f32 to vector<8x32xf32>
    %25 = arith.addf %24, %23 : vector<8x32xf32>
    %26 = arith.divf %24, %25 : vector<8x32xf32>
    %27 = vector.extract_strided_slice %14 {offsets = [0, 64], sizes = [8, 32], strides = [1, 1]} : vector<8x128xf32> to vector<8x32xf32>
    %28 = math.tanh %27 : vector<8x32xf32>
    %29 = vector.extract_strided_slice %14 {offsets = [0, 96], sizes = [8, 32], strides = [1, 1]} : vector<8x128xf32> to vector<8x32xf32>
    %30 = arith.negf %29 : vector<8x32xf32>
    %31 = math.exp %30 : vector<8x32xf32>
    %cst_13 = arith.constant 1.000000e+00 : f32
    %32 = vector.broadcast %cst_13 : f32 to vector<8x32xf32>
    %33 = arith.addf %32, %31 : vector<8x32xf32>
    %34 = arith.divf %32, %33 : vector<8x32xf32>
    %35 = arith.mulf %26, %10 : vector<8x32xf32>
    %36 = arith.mulf %20, %28 : vector<8x32xf32>
    %37 = arith.addf %35, %36 : vector<8x32xf32>
    %38 = math.tanh %37 : vector<8x32xf32>
    %39 = arith.mulf %34, %38 : vector<8x32xf32>
    %c0_14 = arith.constant 0 : index
    %c0_15 = arith.constant 0 : index
    %c0_16 = arith.constant 0 : index
    %40 = vector.load %arg10[%c0_14, %c0_15, %c0_16] : memref<8x8x32xf32, #tpu.memory_space<vmem>>, vector<1x8x32xf32>
    %41 = vector.shape_cast %40 : vector<1x8x32xf32> to vector<8x32xf32>
    %42 = vector.shape_cast %39 : vector<8x32xf32> to vector<1x8x32xf32>
    tpu.vector_store %arg10[%c0_14, %c0_15, %c0_16], %42 {strides = array<i32>} : memref<8x8x32xf32, #tpu.memory_space<vmem>>, vector<1x8x32xf32>,
    %43 = vector.extract_strided_slice %8 {offsets = [1, 0, 0], sizes = [1, 8, 128], strides = [1, 1, 1]} : vector<8x8x128xf32> to vector<1x8x128xf32>
    %44 = vector.shape_cast %43 : vector<1x8x128xf32> to vector<8x128xf32>
    %cst_17 = arith.constant dense<0.000000e+00> : vector<8x128xf32>
    %45 = tpu.matmul %39, %1, %cst_17 {dimension_numbers = #tpu.dot_dimension_numbers<[1], [0], [0], [1], [0, 0, 1, 1], [], []>} : vector<8x32xf32>, vector<32x128xf32>, vector<8x128xf32> -> vector<8x128xf32>
    %46 = arith.addf %44, %45 : vector<8x128xf32>
    %47 = vector.extract_strided_slice %46 {offsets = [0, 0], sizes = [8, 32], strides = [1, 1]} : vector<8x128xf32> to vector<8x32xf32>
    %48 = arith.negf %47 : vector<8x32xf32>
    %49 = math.exp %48 : vector<8x32xf32>
    %cst_18 = arith.constant 1.000000e+00 : f32
    %50 = vector.broadcast %cst_18 : f32 to vector<8x32xf32>
    %51 = arith.addf %50, %49 : vector<8x32xf32>
    %52 = arith.divf %50, %51 : vector<8x32xf32>
    %53 = vector.extract_strided_slice %46 {offsets = [0, 32], sizes = [8, 32], strides = [1, 1]} : vector<8x128xf32> to vector<8x32xf32>
    %54 = arith.negf %53 : vector<8x32xf32>
    %55 = math.exp %54 : vector<8x32xf32>
    %cst_19 = arith.constant 1.000000e+00 : f32
    %56 = vector.broadcast %cst_19 : f32 to vector<8x32xf32>
    %57 = arith.addf %56, %55 : vector<8x32xf32>
    %58 = arith.divf %56, %57 : vector<8x32xf32>
    %59 = vector.extract_strided_slice %46 {offsets = [0, 64], sizes = [8, 32], strides = [1, 1]} : vector<8x128xf32> to vector<8x32xf32>
    %60 = math.tanh %59 : vector<8x32xf32>
    %61 = vector.extract_strided_slice %46 {offsets = [0, 96], sizes = [8, 32], strides = [1, 1]} : vector<8x128xf32> to vector<8x32xf32>
    %62 = arith.negf %61 : vector<8x32xf32>
    %63 = math.exp %62 : vector<8x32xf32>
    %cst_20 = arith.constant 1.000000e+00 : f32
    %64 = vector.broadcast %cst_20 : f32 to vector<8x32xf32>
    %65 = arith.addf %64, %63 : vector<8x32xf32>
    %66 = arith.divf %64, %65 : vector<8x32xf32>
    %67 = arith.mulf %58, %37 : vector<8x32xf32>
    %68 = arith.mulf %52, %60 : vector<8x32xf32>
    %69 = arith.addf %67, %68 : vector<8x32xf32>
    %70 = math.tanh %69 : vector<8x32xf32>
    %71 = arith.mulf %66, %70 : vector<8x32xf32>
    %c1 = arith.constant 1 : index
    %c0_21 = arith.constant 0 : index
    %c0_22 = arith.constant 0 : index
    %72 = vector.load %arg10[%c1, %c0_21, %c0_22] : memref<8x8x32xf32, #tpu.memory_space<vmem>>, vector<1x8x32xf32>
    %73 = vector.shape_cast %72 : vector<1x8x32xf32> to vector<8x32xf32>
    %74 = vector.shape_cast %71 : vector<8x32xf32> to vector<1x8x32xf32>
    tpu.vector_store %arg10[%c1, %c0_21, %c0_22], %74 {strides = array<i32>} : memref<8x8x32xf32, #tpu.memory_space<vmem>>, vector<1x8x32xf32>,
    %75 = vector.extract_strided_slice %8 {offsets = [2, 0, 0], sizes = [1, 8, 128], strides = [1, 1, 1]} : vector<8x8x128xf32> to vector<1x8x128xf32>
    %76 = vector.shape_cast %75 : vector<1x8x128xf32> to vector<8x128xf32>
    %cst_23 = arith.constant dense<0.000000e+00> : vector<8x128xf32>
    %77 = tpu.matmul %71, %1, %cst_23 {dimension_numbers = #tpu.dot_dimension_numbers<[1], [0], [0], [1], [0, 0, 1, 1], [], []>} : vector<8x32xf32>, vector<32x128xf32>, vector<8x128xf32> -> vector<8x128xf32>
    %78 = arith.addf %76, %77 : vector<8x128xf32>
    %79 = vector.extract_strided_slice %78 {offsets = [0, 0], sizes = [8, 32], strides = [1, 1]} : vector<8x128xf32> to vector<8x32xf32>
    %80 = arith.negf %79 : vector<8x32xf32>
    %81 = math.exp %80 : vector<8x32xf32>
    %cst_24 = arith.constant 1.000000e+00 : f32
    %82 = vector.broadcast %cst_24 : f32 to vector<8x32xf32>
    %83 = arith.addf %82, %81 : vector<8x32xf32>
    %84 = arith.divf %82, %83 : vector<8x32xf32>
    %85 = vector.extract_strided_slice %78 {offsets = [0, 32], sizes = [8, 32], strides = [1, 1]} : vector<8x128xf32> to vector<8x32xf32>
    %86 = arith.negf %85 : vector<8x32xf32>
    %87 = math.exp %86 : vector<8x32xf32>
    %cst_25 = arith.constant 1.000000e+00 : f32
    %88 = vector.broadcast %cst_25 : f32 to vector<8x32xf32>
    %89 = arith.addf %88, %87 : vector<8x32xf32>
    %90 = arith.divf %88, %89 : vector<8x32xf32>
    %91 = vector.extract_strided_slice %78 {offsets = [0, 64], sizes = [8, 32], strides = [1, 1]} : vector<8x128xf32> to vector<8x32xf32>
    %92 = math.tanh %91 : vector<8x32xf32>
    %93 = vector.extract_strided_slice %78 {offsets = [0, 96], sizes = [8, 32], strides = [1, 1]} : vector<8x128xf32> to vector<8x32xf32>
    %94 = arith.negf %93 : vector<8x32xf32>
    %95 = math.exp %94 : vector<8x32xf32>
    %cst_26 = arith.constant 1.000000e+00 : f32
    %96 = vector.broadcast %cst_26 : f32 to vector<8x32xf32>
    %97 = arith.addf %96, %95 : vector<8x32xf32>
    %98 = arith.divf %96, %97 : vector<8x32xf32>
    %99 = arith.mulf %90, %69 : vector<8x32xf32>
    %100 = arith.mulf %84, %92 : vector<8x32xf32>
    %101 = arith.addf %99, %100 : vector<8x32xf32>
    %102 = math.tanh %101 : vector<8x32xf32>
    %103 = arith.mulf %98, %102 : vector<8x32xf32>
    %c2 = arith.constant 2 : index
    %c0_27 = arith.constant 0 : index
    %c0_28 = arith.constant 0 : index
    %104 = vector.load %arg10[%c2, %c0_27, %c0_28] : memref<8x8x32xf32, #tpu.memory_space<vmem>>, vector<1x8x32xf32>
    %105 = vector.shape_cast %104 : vector<1x8x32xf32> to vector<8x32xf32>
    %106 = vector.shape_cast %103 : vector<8x32xf32> to vector<1x8x32xf32>
    tpu.vector_store %arg10[%c2, %c0_27, %c0_28], %106 {strides = array<i32>} : memref<8x8x32xf32, #tpu.memory_space<vmem>>, vector<1x8x32xf32>,
    %107 = vector.extract_strided_slice %8 {offsets = [3, 0, 0], sizes = [1, 8, 128], strides = [1, 1, 1]} : vector<8x8x128xf32> to vector<1x8x128xf32>
    %108 = vector.shape_cast %107 : vector<1x8x128xf32> to vector<8x128xf32>
    %cst_29 = arith.constant dense<0.000000e+00> : vector<8x128xf32>
    %109 = tpu.matmul %103, %1, %cst_29 {dimension_numbers = #tpu.dot_dimension_numbers<[1], [0], [0], [1], [0, 0, 1, 1], [], []>} : vector<8x32xf32>, vector<32x128xf32>, vector<8x128xf32> -> vector<8x128xf32>
    %110 = arith.addf %108, %109 : vector<8x128xf32>
    %111 = vector.extract_strided_slice %110 {offsets = [0, 0], sizes = [8, 32], strides = [1, 1]} : vector<8x128xf32> to vector<8x32xf32>
    %112 = arith.negf %111 : vector<8x32xf32>
    %113 = math.exp %112 : vector<8x32xf32>
    %cst_30 = arith.constant 1.000000e+00 : f32
    %114 = vector.broadcast %cst_30 : f32 to vector<8x32xf32>
    %115 = arith.addf %114, %113 : vector<8x32xf32>
    %116 = arith.divf %114, %115 : vector<8x32xf32>
    %117 = vector.extract_strided_slice %110 {offsets = [0, 32], sizes = [8, 32], strides = [1, 1]} : vector<8x128xf32> to vector<8x32xf32>
    %118 = arith.negf %117 : vector<8x32xf32>
    %119 = math.exp %118 : vector<8x32xf32>
    %cst_31 = arith.constant 1.000000e+00 : f32
    %120 = vector.broadcast %cst_31 : f32 to vector<8x32xf32>
    %121 = arith.addf %120, %119 : vector<8x32xf32>
    %122 = arith.divf %120, %121 : vector<8x32xf32>
    %123 = vector.extract_strided_slice %110 {offsets = [0, 64], sizes = [8, 32], strides = [1, 1]} : vector<8x128xf32> to vector<8x32xf32>
    %124 = math.tanh %123 : vector<8x32xf32>
    %125 = vector.extract_strided_slice %110 {offsets = [0, 96], sizes = [8, 32], strides = [1, 1]} : vector<8x128xf32> to vector<8x32xf32>
    %126 = arith.negf %125 : vector<8x32xf32>
    %127 = math.exp %126 : vector<8x32xf32>
    %cst_32 = arith.constant 1.000000e+00 : f32
    %128 = vector.broadcast %cst_32 : f32 to vector<8x32xf32>
    %129 = arith.addf %128, %127 : vector<8x32xf32>
    %130 = arith.divf %128, %129 : vector<8x32xf32>
    %131 = arith.mulf %122, %101 : vector<8x32xf32>
    %132 = arith.mulf %116, %124 : vector<8x32xf32>
    %133 = arith.addf %131, %132 : vector<8x32xf32>
    %134 = math.tanh %133 : vector<8x32xf32>
    %135 = arith.mulf %130, %134 : vector<8x32xf32>
    %c3 = arith.constant 3 : index
    %c0_33 = arith.constant 0 : index
    %c0_34 = arith.constant 0 : index
    %136 = vector.load %arg10[%c3, %c0_33, %c0_34] : memref<8x8x32xf32, #tpu.memory_space<vmem>>, vector<1x8x32xf32>
    %137 = vector.shape_cast %136 : vector<1x8x32xf32> to vector<8x32xf32>
    %138 = vector.shape_cast %135 : vector<8x32xf32> to vector<1x8x32xf32>
    tpu.vector_store %arg10[%c3, %c0_33, %c0_34], %138 {strides = array<i32>} : memref<8x8x32xf32, #tpu.memory_space<vmem>>, vector<1x8x32xf32>,
    %139 = vector.extract_strided_slice %8 {offsets = [4, 0, 0], sizes = [1, 8, 128], strides = [1, 1, 1]} : vector<8x8x128xf32> to vector<1x8x128xf32>
    %140 = vector.shape_cast %139 : vector<1x8x128xf32> to vector<8x128xf32>
    %cst_35 = arith.constant dense<0.000000e+00> : vector<8x128xf32>
    %141 = tpu.matmul %135, %1, %cst_35 {dimension_numbers = #tpu.dot_dimension_numbers<[1], [0], [0], [1], [0, 0, 1, 1], [], []>} : vector<8x32xf32>, vector<32x128xf32>, vector<8x128xf32> -> vector<8x128xf32>
    %142 = arith.addf %140, %141 : vector<8x128xf32>
    %143 = vector.extract_strided_slice %142 {offsets = [0, 0], sizes = [8, 32], strides = [1, 1]} : vector<8x128xf32> to vector<8x32xf32>
    %144 = arith.negf %143 : vector<8x32xf32>
    %145 = math.exp %144 : vector<8x32xf32>
    %cst_36 = arith.constant 1.000000e+00 : f32
    %146 = vector.broadcast %cst_36 : f32 to vector<8x32xf32>
    %147 = arith.addf %146, %145 : vector<8x32xf32>
    %148 = arith.divf %146, %147 : vector<8x32xf32>
    %149 = vector.extract_strided_slice %142 {offsets = [0, 32], sizes = [8, 32], strides = [1, 1]} : vector<8x128xf32> to vector<8x32xf32>
    %150 = arith.negf %149 : vector<8x32xf32>
    %151 = math.exp %150 : vector<8x32xf32>
    %cst_37 = arith.constant 1.000000e+00 : f32
    %152 = vector.broadcast %cst_37 : f32 to vector<8x32xf32>
    %153 = arith.addf %152, %151 : vector<8x32xf32>
    %154 = arith.divf %152, %153 : vector<8x32xf32>
    %155 = vector.extract_strided_slice %142 {offsets = [0, 64], sizes = [8, 32], strides = [1, 1]} : vector<8x128xf32> to vector<8x32xf32>
    %156 = math.tanh %155 : vector<8x32xf32>
    %157 = vector.extract_strided_slice %142 {offsets = [0, 96], sizes = [8, 32], strides = [1, 1]} : vector<8x128xf32> to vector<8x32xf32>
    %158 = arith.negf %157 : vector<8x32xf32>
    %159 = math.exp %158 : vector<8x32xf32>
    %cst_38 = arith.constant 1.000000e+00 : f32
    %160 = vector.broadcast %cst_38 : f32 to vector<8x32xf32>
    %161 = arith.addf %160, %159 : vector<8x32xf32>
    %162 = arith.divf %160, %161 : vector<8x32xf32>
    %163 = arith.mulf %154, %133 : vector<8x32xf32>
    %164 = arith.mulf %148, %156 : vector<8x32xf32>
    %165 = arith.addf %163, %164 : vector<8x32xf32>
    %166 = math.tanh %165 : vector<8x32xf32>
    %167 = arith.mulf %162, %166 : vector<8x32xf32>
    %c4 = arith.constant 4 : index
    %c0_39 = arith.constant 0 : index
    %c0_40 = arith.constant 0 : index
    %168 = vector.load %arg10[%c4, %c0_39, %c0_40] : memref<8x8x32xf32, #tpu.memory_space<vmem>>, vector<1x8x32xf32>
    %169 = vector.shape_cast %168 : vector<1x8x32xf32> to vector<8x32xf32>
    %170 = vector.shape_cast %167 : vector<8x32xf32> to vector<1x8x32xf32>
    tpu.vector_store %arg10[%c4, %c0_39, %c0_40], %170 {strides = array<i32>} : memref<8x8x32xf32, #tpu.memory_space<vmem>>, vector<1x8x32xf32>,
    %171 = vector.extract_strided_slice %8 {offsets = [5, 0, 0], sizes = [1, 8, 128], strides = [1, 1, 1]} : vector<8x8x128xf32> to vector<1x8x128xf32>
    %172 = vector.shape_cast %171 : vector<1x8x128xf32> to vector<8x128xf32>
    %cst_41 = arith.constant dense<0.000000e+00> : vector<8x128xf32>
    %173 = tpu.matmul %167, %1, %cst_41 {dimension_numbers = #tpu.dot_dimension_numbers<[1], [0], [0], [1], [0, 0, 1, 1], [], []>} : vector<8x32xf32>, vector<32x128xf32>, vector<8x128xf32> -> vector<8x128xf32>
    %174 = arith.addf %172, %173 : vector<8x128xf32>
    %175 = vector.extract_strided_slice %174 {offsets = [0, 0], sizes = [8, 32], strides = [1, 1]} : vector<8x128xf32> to vector<8x32xf32>
    %176 = arith.negf %175 : vector<8x32xf32>
    %177 = math.exp %176 : vector<8x32xf32>
    %cst_42 = arith.constant 1.000000e+00 : f32
    %178 = vector.broadcast %cst_42 : f32 to vector<8x32xf32>
    %179 = arith.addf %178, %177 : vector<8x32xf32>
    %180 = arith.divf %178, %179 : vector<8x32xf32>
    %181 = vector.extract_strided_slice %174 {offsets = [0, 32], sizes = [8, 32], strides = [1, 1]} : vector<8x128xf32> to vector<8x32xf32>
    %182 = arith.negf %181 : vector<8x32xf32>
    %183 = math.exp %182 : vector<8x32xf32>
    %cst_43 = arith.constant 1.000000e+00 : f32
    %184 = vector.broadcast %cst_43 : f32 to vector<8x32xf32>
    %185 = arith.addf %184, %183 : vector<8x32xf32>
    %186 = arith.divf %184, %185 : vector<8x32xf32>
    %187 = vector.extract_strided_slice %174 {offsets = [0, 64], sizes = [8, 32], strides = [1, 1]} : vector<8x128xf32> to vector<8x32xf32>
    %188 = math.tanh %187 : vector<8x32xf32>
    %189 = vector.extract_strided_slice %174 {offsets = [0, 96], sizes = [8, 32], strides = [1, 1]} : vector<8x128xf32> to vector<8x32xf32>
    %190 = arith.negf %189 : vector<8x32xf32>
    %191 = math.exp %190 : vector<8x32xf32>
    %cst_44 = arith.constant 1.000000e+00 : f32
    %192 = vector.broadcast %cst_44 : f32 to vector<8x32xf32>
    %193 = arith.addf %192, %191 : vector<8x32xf32>
    %194 = arith.divf %192, %193 : vector<8x32xf32>
    %195 = arith.mulf %186, %165 : vector<8x32xf32>
    %196 = arith.mulf %180, %188 : vector<8x32xf32>
    %197 = arith.addf %195, %196 : vector<8x32xf32>
    %198 = math.tanh %197 : vector<8x32xf32>
    %199 = arith.mulf %194, %198 : vector<8x32xf32>
    %c5 = arith.constant 5 : index
    %c0_45 = arith.constant 0 : index
    %c0_46 = arith.constant 0 : index
    %200 = vector.load %arg10[%c5, %c0_45, %c0_46] : memref<8x8x32xf32, #tpu.memory_space<vmem>>, vector<1x8x32xf32>
    %201 = vector.shape_cast %200 : vector<1x8x32xf32> to vector<8x32xf32>
    %202 = vector.shape_cast %199 : vector<8x32xf32> to vector<1x8x32xf32>
    tpu.vector_store %arg10[%c5, %c0_45, %c0_46], %202 {strides = array<i32>} : memref<8x8x32xf32, #tpu.memory_space<vmem>>, vector<1x8x32xf32>,
    %203 = vector.extract_strided_slice %8 {offsets = [6, 0, 0], sizes = [1, 8, 128], strides = [1, 1, 1]} : vector<8x8x128xf32> to vector<1x8x128xf32>
    %204 = vector.shape_cast %203 : vector<1x8x128xf32> to vector<8x128xf32>
    %cst_47 = arith.constant dense<0.000000e+00> : vector<8x128xf32>
    %205 = tpu.matmul %199, %1, %cst_47 {dimension_numbers = #tpu.dot_dimension_numbers<[1], [0], [0], [1], [0, 0, 1, 1], [], []>} : vector<8x32xf32>, vector<32x128xf32>, vector<8x128xf32> -> vector<8x128xf32>
    %206 = arith.addf %204, %205 : vector<8x128xf32>
    %207 = vector.extract_strided_slice %206 {offsets = [0, 0], sizes = [8, 32], strides = [1, 1]} : vector<8x128xf32> to vector<8x32xf32>
    %208 = arith.negf %207 : vector<8x32xf32>
    %209 = math.exp %208 : vector<8x32xf32>
    %cst_48 = arith.constant 1.000000e+00 : f32
    %210 = vector.broadcast %cst_48 : f32 to vector<8x32xf32>
    %211 = arith.addf %210, %209 : vector<8x32xf32>
    %212 = arith.divf %210, %211 : vector<8x32xf32>
    %213 = vector.extract_strided_slice %206 {offsets = [0, 32], sizes = [8, 32], strides = [1, 1]} : vector<8x128xf32> to vector<8x32xf32>
    %214 = arith.negf %213 : vector<8x32xf32>
    %215 = math.exp %214 : vector<8x32xf32>
    %cst_49 = arith.constant 1.000000e+00 : f32
    %216 = vector.broadcast %cst_49 : f32 to vector<8x32xf32>
    %217 = arith.addf %216, %215 : vector<8x32xf32>
    %218 = arith.divf %216, %217 : vector<8x32xf32>
    %219 = vector.extract_strided_slice %206 {offsets = [0, 64], sizes = [8, 32], strides = [1, 1]} : vector<8x128xf32> to vector<8x32xf32>
    %220 = math.tanh %219 : vector<8x32xf32>
    %221 = vector.extract_strided_slice %206 {offsets = [0, 96], sizes = [8, 32], strides = [1, 1]} : vector<8x128xf32> to vector<8x32xf32>
    %222 = arith.negf %221 : vector<8x32xf32>
    %223 = math.exp %222 : vector<8x32xf32>
    %cst_50 = arith.constant 1.000000e+00 : f32
    %224 = vector.broadcast %cst_50 : f32 to vector<8x32xf32>
    %225 = arith.addf %224, %223 : vector<8x32xf32>
    %226 = arith.divf %224, %225 : vector<8x32xf32>
    %227 = arith.mulf %218, %197 : vector<8x32xf32>
    %228 = arith.mulf %212, %220 : vector<8x32xf32>
    %229 = arith.addf %227, %228 : vector<8x32xf32>
    %230 = math.tanh %229 : vector<8x32xf32>
    %231 = arith.mulf %226, %230 : vector<8x32xf32>
    %c6 = arith.constant 6 : index
    %c0_51 = arith.constant 0 : index
    %c0_52 = arith.constant 0 : index
    %232 = vector.load %arg10[%c6, %c0_51, %c0_52] : memref<8x8x32xf32, #tpu.memory_space<vmem>>, vector<1x8x32xf32>
    %233 = vector.shape_cast %232 : vector<1x8x32xf32> to vector<8x32xf32>
    %234 = vector.shape_cast %231 : vector<8x32xf32> to vector<1x8x32xf32>
    tpu.vector_store %arg10[%c6, %c0_51, %c0_52], %234 {strides = array<i32>} : memref<8x8x32xf32, #tpu.memory_space<vmem>>, vector<1x8x32xf32>,
    %235 = vector.extract_strided_slice %8 {offsets = [7, 0, 0], sizes = [1, 8, 128], strides = [1, 1, 1]} : vector<8x8x128xf32> to vector<1x8x128xf32>
    %236 = vector.shape_cast %235 : vector<1x8x128xf32> to vector<8x128xf32>
    %cst_53 = arith.constant dense<0.000000e+00> : vector<8x128xf32>
    %237 = tpu.matmul %231, %1, %cst_53 {dimension_numbers = #tpu.dot_dimension_numbers<[1], [0], [0], [1], [0, 0, 1, 1], [], []>} : vector<8x32xf32>, vector<32x128xf32>, vector<8x128xf32> -> vector<8x128xf32>
    %238 = arith.addf %236, %237 : vector<8x128xf32>
    %239 = vector.extract_strided_slice %238 {offsets = [0, 0], sizes = [8, 32], strides = [1, 1]} : vector<8x128xf32> to vector<8x32xf32>
    %240 = arith.negf %239 : vector<8x32xf32>
    %241 = math.exp %240 : vector<8x32xf32>
    %cst_54 = arith.constant 1.000000e+00 : f32
    %242 = vector.broadcast %cst_54 : f32 to vector<8x32xf32>
    %243 = arith.addf %242, %241 : vector<8x32xf32>
    %244 = arith.divf %242, %243 : vector<8x32xf32>
    %245 = vector.extract_strided_slice %238 {offsets = [0, 32], sizes = [8, 32], strides = [1, 1]} : vector<8x128xf32> to vector<8x32xf32>
    %246 = arith.negf %245 : vector<8x32xf32>
    %247 = math.exp %246 : vector<8x32xf32>
    %cst_55 = arith.constant 1.000000e+00 : f32
    %248 = vector.broadcast %cst_55 : f32 to vector<8x32xf32>
    %249 = arith.addf %248, %247 : vector<8x32xf32>
    %250 = arith.divf %248, %249 : vector<8x32xf32>
    %251 = vector.extract_strided_slice %238 {offsets = [0, 64], sizes = [8, 32], strides = [1, 1]} : vector<8x128xf32> to vector<8x32xf32>
    %252 = math.tanh %251 : vector<8x32xf32>
    %253 = vector.extract_strided_slice %238 {offsets = [0, 96], sizes = [8, 32], strides = [1, 1]} : vector<8x128xf32> to vector<8x32xf32>
    %254 = arith.negf %253 : vector<8x32xf32>
    %255 = math.exp %254 : vector<8x32xf32>
    %cst_56 = arith.constant 1.000000e+00 : f32
    %256 = vector.broadcast %cst_56 : f32 to vector<8x32xf32>
    %257 = arith.addf %256, %255 : vector<8x32xf32>
    %258 = arith.divf %256, %257 : vector<8x32xf32>
    %259 = arith.mulf %250, %229 : vector<8x32xf32>
    %260 = arith.mulf %244, %252 : vector<8x32xf32>
    %261 = arith.addf %259, %260 : vector<8x32xf32>
    %262 = math.tanh %261 : vector<8x32xf32>
    %263 = arith.mulf %258, %262 : vector<8x32xf32>
    %c7 = arith.constant 7 : index
    %c0_57 = arith.constant 0 : index
    %c0_58 = arith.constant 0 : index
    %264 = vector.load %arg10[%c7, %c0_57, %c0_58] : memref<8x8x32xf32, #tpu.memory_space<vmem>>, vector<1x8x32xf32>
    %265 = vector.shape_cast %264 : vector<1x8x32xf32> to vector<8x32xf32>
    %266 = vector.shape_cast %263 : vector<8x32xf32> to vector<1x8x32xf32>
    tpu.vector_store %arg10[%c7, %c0_57, %c0_58], %266 {strides = array<i32>} : memref<8x8x32xf32, #tpu.memory_space<vmem>>, vector<1x8x32xf32>,
    %c0_59 = arith.constant 0 : index
    %c0_60 = arith.constant 0 : index
    %c0_61 = arith.constant 0 : index
    %267 = vector.load %arg8[%c0_59, %c0_60, %c0_61] : memref<2x8x32xf32, #tpu.memory_space<vmem>>, vector<1x8x32xf32>
    %268 = vector.shape_cast %267 : vector<1x8x32xf32> to vector<8x32xf32>
    %269 = vector.shape_cast %263 : vector<8x32xf32> to vector<1x8x32xf32>
    tpu.vector_store %arg8[%c0_59, %c0_60, %c0_61], %269 {strides = array<i32>} : memref<2x8x32xf32, #tpu.memory_space<vmem>>, vector<1x8x32xf32>,
    %c0_62 = arith.constant 0 : index
    %c0_63 = arith.constant 0 : index
    %c0_64 = arith.constant 0 : index
    %270 = vector.load %arg9[%c0_62, %c0_63, %c0_64] : memref<2x8x32xf32, #tpu.memory_space<vmem>>, vector<1x8x32xf32>
    %271 = vector.shape_cast %270 : vector<1x8x32xf32> to vector<8x32xf32>
    %272 = vector.shape_cast %261 : vector<8x32xf32> to vector<1x8x32xf32>
    tpu.vector_store %arg9[%c0_62, %c0_63, %c0_64], %272 {strides = array<i32>} : memref<2x8x32xf32, #tpu.memory_space<vmem>>, vector<1x8x32xf32>,
    %c0_65 = arith.constant 0 : index
    %c0_66 = arith.constant 0 : index
    %273 = vector.load %arg5[%c0_65, %c0_66] : memref<32x128xf32, #tpu.memory_space<vmem>>, vector<32x128xf32>
    %c0_67 = arith.constant 0 : index
    %c0_68 = arith.constant 0 : index
    %274 = vector.load %arg6[%c0_67, %c0_68] : memref<32x128xf32, #tpu.memory_space<vmem>>, vector<32x128xf32>
    %c0_69 = arith.constant 0 : index
    %c0_70 = arith.constant 0 : index
    %275 = vector.load %arg7[%c0_69, %c0_70] : memref<1x128xf32, #tpu.memory_space<vmem>>, vector<1x128xf32>
    %c0_71 = arith.constant 0 : index
    %c0_72 = arith.constant 0 : index
    %c0_73 = arith.constant 0 : index
    %276 = vector.load %arg10[%c0_71, %c0_72, %c0_73] : memref<8x8x32xf32, #tpu.memory_space<vmem>>, vector<8x8x32xf32>
    %277 = vector.shape_cast %276 : vector<8x8x32xf32> to vector<64x32xf32>
    %cst_74 = arith.constant dense<0.000000e+00> : vector<64x128xf32>
    %278 = tpu.matmul %277, %273, %cst_74 {dimension_numbers = #tpu.dot_dimension_numbers<[1], [0], [0], [1], [0, 0, 1, 1], [], []>} : vector<64x32xf32>, vector<32x128xf32>, vector<64x128xf32> -> vector<64x128xf32>
    %279 = vector.broadcast %275 : vector<1x128xf32> to vector<64x128xf32>
    %280 = arith.addf %278, %279 : vector<64x128xf32>
    %281 = vector.shape_cast %280 : vector<64x128xf32> to vector<8x8x128xf32>
    %cst_75 = arith.constant 0.000000e+00 : f32
    %282 = vector.broadcast %cst_75 : f32 to vector<8x32xf32>
    %cst_76 = arith.constant 0.000000e+00 : f32
    %283 = vector.broadcast %cst_76 : f32 to vector<8x32xf32>
    %284 = vector.extract_strided_slice %281 {offsets = [0, 0, 0], sizes = [1, 8, 128], strides = [1, 1, 1]} : vector<8x8x128xf32> to vector<1x8x128xf32>
    %285 = vector.shape_cast %284 : vector<1x8x128xf32> to vector<8x128xf32>
    %cst_77 = arith.constant dense<0.000000e+00> : vector<8x128xf32>
    %286 = tpu.matmul %282, %274, %cst_77 {dimension_numbers = #tpu.dot_dimension_numbers<[1], [0], [0], [1], [0, 0, 1, 1], [], []>} : vector<8x32xf32>, vector<32x128xf32>, vector<8x128xf32> -> vector<8x128xf32>
    %287 = arith.addf %285, %286 : vector<8x128xf32>
    %288 = vector.extract_strided_slice %287 {offsets = [0, 0], sizes = [8, 32], strides = [1, 1]} : vector<8x128xf32> to vector<8x32xf32>
    %289 = arith.negf %288 : vector<8x32xf32>
    %290 = math.exp %289 : vector<8x32xf32>
    %cst_78 = arith.constant 1.000000e+00 : f32
    %291 = vector.broadcast %cst_78 : f32 to vector<8x32xf32>
    %292 = arith.addf %291, %290 : vector<8x32xf32>
    %293 = arith.divf %291, %292 : vector<8x32xf32>
    %294 = vector.extract_strided_slice %287 {offsets = [0, 32], sizes = [8, 32], strides = [1, 1]} : vector<8x128xf32> to vector<8x32xf32>
    %295 = arith.negf %294 : vector<8x32xf32>
    %296 = math.exp %295 : vector<8x32xf32>
    %cst_79 = arith.constant 1.000000e+00 : f32
    %297 = vector.broadcast %cst_79 : f32 to vector<8x32xf32>
    %298 = arith.addf %297, %296 : vector<8x32xf32>
    %299 = arith.divf %297, %298 : vector<8x32xf32>
    %300 = vector.extract_strided_slice %287 {offsets = [0, 64], sizes = [8, 32], strides = [1, 1]} : vector<8x128xf32> to vector<8x32xf32>
    %301 = math.tanh %300 : vector<8x32xf32>
    %302 = vector.extract_strided_slice %287 {offsets = [0, 96], sizes = [8, 32], strides = [1, 1]} : vector<8x128xf32> to vector<8x32xf32>
    %303 = arith.negf %302 : vector<8x32xf32>
    %304 = math.exp %303 : vector<8x32xf32>
    %cst_80 = arith.constant 1.000000e+00 : f32
    %305 = vector.broadcast %cst_80 : f32 to vector<8x32xf32>
    %306 = arith.addf %305, %304 : vector<8x32xf32>
    %307 = arith.divf %305, %306 : vector<8x32xf32>
    %308 = arith.mulf %299, %283 : vector<8x32xf32>
    %309 = arith.mulf %293, %301 : vector<8x32xf32>
    %310 = arith.addf %308, %309 : vector<8x32xf32>
    %311 = math.tanh %310 : vector<8x32xf32>
    %312 = arith.mulf %307, %311 : vector<8x32xf32>
    %313 = vector.extract_strided_slice %281 {offsets = [1, 0, 0], sizes = [1, 8, 128], strides = [1, 1, 1]} : vector<8x8x128xf32> to vector<1x8x128xf32>
    %314 = vector.shape_cast %313 : vector<1x8x128xf32> to vector<8x128xf32>
    %cst_81 = arith.constant dense<0.000000e+00> : vector<8x128xf32>
    %315 = tpu.matmul %312, %274, %cst_81 {dimension_numbers = #tpu.dot_dimension_numbers<[1], [0], [0], [1], [0, 0, 1, 1], [], []>} : vector<8x32xf32>, vector<32x128xf32>, vector<8x128xf32> -> vector<8x128xf32>
    %316 = arith.addf %314, %315 : vector<8x128xf32>
    %317 = vector.extract_strided_slice %316 {offsets = [0, 0], sizes = [8, 32], strides = [1, 1]} : vector<8x128xf32> to vector<8x32xf32>
    %318 = arith.negf %317 : vector<8x32xf32>
    %319 = math.exp %318 : vector<8x32xf32>
    %cst_82 = arith.constant 1.000000e+00 : f32
    %320 = vector.broadcast %cst_82 : f32 to vector<8x32xf32>
    %321 = arith.addf %320, %319 : vector<8x32xf32>
    %322 = arith.divf %320, %321 : vector<8x32xf32>
    %323 = vector.extract_strided_slice %316 {offsets = [0, 32], sizes = [8, 32], strides = [1, 1]} : vector<8x128xf32> to vector<8x32xf32>
    %324 = arith.negf %323 : vector<8x32xf32>
    %325 = math.exp %324 : vector<8x32xf32>
    %cst_83 = arith.constant 1.000000e+00 : f32
    %326 = vector.broadcast %cst_83 : f32 to vector<8x32xf32>
    %327 = arith.addf %326, %325 : vector<8x32xf32>
    %328 = arith.divf %326, %327 : vector<8x32xf32>
    %329 = vector.extract_strided_slice %316 {offsets = [0, 64], sizes = [8, 32], strides = [1, 1]} : vector<8x128xf32> to vector<8x32xf32>
    %330 = math.tanh %329 : vector<8x32xf32>
    %331 = vector.extract_strided_slice %316 {offsets = [0, 96], sizes = [8, 32], strides = [1, 1]} : vector<8x128xf32> to vector<8x32xf32>
    %332 = arith.negf %331 : vector<8x32xf32>
    %333 = math.exp %332 : vector<8x32xf32>
    %cst_84 = arith.constant 1.000000e+00 : f32
    %334 = vector.broadcast %cst_84 : f32 to vector<8x32xf32>
    %335 = arith.addf %334, %333 : vector<8x32xf32>
    %336 = arith.divf %334, %335 : vector<8x32xf32>
    %337 = arith.mulf %328, %310 : vector<8x32xf32>
    %338 = arith.mulf %322, %330 : vector<8x32xf32>
    %339 = arith.addf %337, %338 : vector<8x32xf32>
    %340 = math.tanh %339 : vector<8x32xf32>
    %341 = arith.mulf %336, %340 : vector<8x32xf32>
    %342 = vector.extract_strided_slice %281 {offsets = [2, 0, 0], sizes = [1, 8, 128], strides = [1, 1, 1]} : vector<8x8x128xf32> to vector<1x8x128xf32>
    %343 = vector.shape_cast %342 : vector<1x8x128xf32> to vector<8x128xf32>
    %cst_85 = arith.constant dense<0.000000e+00> : vector<8x128xf32>
    %344 = tpu.matmul %341, %274, %cst_85 {dimension_numbers = #tpu.dot_dimension_numbers<[1], [0], [0], [1], [0, 0, 1, 1], [], []>} : vector<8x32xf32>, vector<32x128xf32>, vector<8x128xf32> -> vector<8x128xf32>
    %345 = arith.addf %343, %344 : vector<8x128xf32>
    %346 = vector.extract_strided_slice %345 {offsets = [0, 0], sizes = [8, 32], strides = [1, 1]} : vector<8x128xf32> to vector<8x32xf32>
    %347 = arith.negf %346 : vector<8x32xf32>
    %348 = math.exp %347 : vector<8x32xf32>
    %cst_86 = arith.constant 1.000000e+00 : f32
    %349 = vector.broadcast %cst_86 : f32 to vector<8x32xf32>
    %350 = arith.addf %349, %348 : vector<8x32xf32>
    %351 = arith.divf %349, %350 : vector<8x32xf32>
    %352 = vector.extract_strided_slice %345 {offsets = [0, 32], sizes = [8, 32], strides = [1, 1]} : vector<8x128xf32> to vector<8x32xf32>
    %353 = arith.negf %352 : vector<8x32xf32>
    %354 = math.exp %353 : vector<8x32xf32>
    %cst_87 = arith.constant 1.000000e+00 : f32
    %355 = vector.broadcast %cst_87 : f32 to vector<8x32xf32>
    %356 = arith.addf %355, %354 : vector<8x32xf32>
    %357 = arith.divf %355, %356 : vector<8x32xf32>
    %358 = vector.extract_strided_slice %345 {offsets = [0, 64], sizes = [8, 32], strides = [1, 1]} : vector<8x128xf32> to vector<8x32xf32>
    %359 = math.tanh %358 : vector<8x32xf32>
    %360 = vector.extract_strided_slice %345 {offsets = [0, 96], sizes = [8, 32], strides = [1, 1]} : vector<8x128xf32> to vector<8x32xf32>
    %361 = arith.negf %360 : vector<8x32xf32>
    %362 = math.exp %361 : vector<8x32xf32>
    %cst_88 = arith.constant 1.000000e+00 : f32
    %363 = vector.broadcast %cst_88 : f32 to vector<8x32xf32>
    %364 = arith.addf %363, %362 : vector<8x32xf32>
    %365 = arith.divf %363, %364 : vector<8x32xf32>
    %366 = arith.mulf %357, %339 : vector<8x32xf32>
    %367 = arith.mulf %351, %359 : vector<8x32xf32>
    %368 = arith.addf %366, %367 : vector<8x32xf32>
    %369 = math.tanh %368 : vector<8x32xf32>
    %370 = arith.mulf %365, %369 : vector<8x32xf32>
    %371 = vector.extract_strided_slice %281 {offsets = [3, 0, 0], sizes = [1, 8, 128], strides = [1, 1, 1]} : vector<8x8x128xf32> to vector<1x8x128xf32>
    %372 = vector.shape_cast %371 : vector<1x8x128xf32> to vector<8x128xf32>
    %cst_89 = arith.constant dense<0.000000e+00> : vector<8x128xf32>
    %373 = tpu.matmul %370, %274, %cst_89 {dimension_numbers = #tpu.dot_dimension_numbers<[1], [0], [0], [1], [0, 0, 1, 1], [], []>} : vector<8x32xf32>, vector<32x128xf32>, vector<8x128xf32> -> vector<8x128xf32>
    %374 = arith.addf %372, %373 : vector<8x128xf32>
    %375 = vector.extract_strided_slice %374 {offsets = [0, 0], sizes = [8, 32], strides = [1, 1]} : vector<8x128xf32> to vector<8x32xf32>
    %376 = arith.negf %375 : vector<8x32xf32>
    %377 = math.exp %376 : vector<8x32xf32>
    %cst_90 = arith.constant 1.000000e+00 : f32
    %378 = vector.broadcast %cst_90 : f32 to vector<8x32xf32>
    %379 = arith.addf %378, %377 : vector<8x32xf32>
    %380 = arith.divf %378, %379 : vector<8x32xf32>
    %381 = vector.extract_strided_slice %374 {offsets = [0, 32], sizes = [8, 32], strides = [1, 1]} : vector<8x128xf32> to vector<8x32xf32>
    %382 = arith.negf %381 : vector<8x32xf32>
    %383 = math.exp %382 : vector<8x32xf32>
    %cst_91 = arith.constant 1.000000e+00 : f32
    %384 = vector.broadcast %cst_91 : f32 to vector<8x32xf32>
    %385 = arith.addf %384, %383 : vector<8x32xf32>
    %386 = arith.divf %384, %385 : vector<8x32xf32>
    %387 = vector.extract_strided_slice %374 {offsets = [0, 64], sizes = [8, 32], strides = [1, 1]} : vector<8x128xf32> to vector<8x32xf32>
    %388 = math.tanh %387 : vector<8x32xf32>
    %389 = vector.extract_strided_slice %374 {offsets = [0, 96], sizes = [8, 32], strides = [1, 1]} : vector<8x128xf32> to vector<8x32xf32>
    %390 = arith.negf %389 : vector<8x32xf32>
    %391 = math.exp %390 : vector<8x32xf32>
    %cst_92 = arith.constant 1.000000e+00 : f32
    %392 = vector.broadcast %cst_92 : f32 to vector<8x32xf32>
    %393 = arith.addf %392, %391 : vector<8x32xf32>
    %394 = arith.divf %392, %393 : vector<8x32xf32>
    %395 = arith.mulf %386, %368 : vector<8x32xf32>
    %396 = arith.mulf %380, %388 : vector<8x32xf32>
    %397 = arith.addf %395, %396 : vector<8x32xf32>
    %398 = math.tanh %397 : vector<8x32xf32>
    %399 = arith.mulf %394, %398 : vector<8x32xf32>
    %400 = vector.extract_strided_slice %281 {offsets = [4, 0, 0], sizes = [1, 8, 128], strides = [1, 1, 1]} : vector<8x8x128xf32> to vector<1x8x128xf32>
    %401 = vector.shape_cast %400 : vector<1x8x128xf32> to vector<8x128xf32>
    %cst_93 = arith.constant dense<0.000000e+00> : vector<8x128xf32>
    %402 = tpu.matmul %399, %274, %cst_93 {dimension_numbers = #tpu.dot_dimension_numbers<[1], [0], [0], [1], [0, 0, 1, 1], [], []>} : vector<8x32xf32>, vector<32x128xf32>, vector<8x128xf32> -> vector<8x128xf32>
    %403 = arith.addf %401, %402 : vector<8x128xf32>
    %404 = vector.extract_strided_slice %403 {offsets = [0, 0], sizes = [8, 32], strides = [1, 1]} : vector<8x128xf32> to vector<8x32xf32>
    %405 = arith.negf %404 : vector<8x32xf32>
    %406 = math.exp %405 : vector<8x32xf32>
    %cst_94 = arith.constant 1.000000e+00 : f32
    %407 = vector.broadcast %cst_94 : f32 to vector<8x32xf32>
    %408 = arith.addf %407, %406 : vector<8x32xf32>
    %409 = arith.divf %407, %408 : vector<8x32xf32>
    %410 = vector.extract_strided_slice %403 {offsets = [0, 32], sizes = [8, 32], strides = [1, 1]} : vector<8x128xf32> to vector<8x32xf32>
    %411 = arith.negf %410 : vector<8x32xf32>
    %412 = math.exp %411 : vector<8x32xf32>
    %cst_95 = arith.constant 1.000000e+00 : f32
    %413 = vector.broadcast %cst_95 : f32 to vector<8x32xf32>
    %414 = arith.addf %413, %412 : vector<8x32xf32>
    %415 = arith.divf %413, %414 : vector<8x32xf32>
    %416 = vector.extract_strided_slice %403 {offsets = [0, 64], sizes = [8, 32], strides = [1, 1]} : vector<8x128xf32> to vector<8x32xf32>
    %417 = math.tanh %416 : vector<8x32xf32>
    %418 = vector.extract_strided_slice %403 {offsets = [0, 96], sizes = [8, 32], strides = [1, 1]} : vector<8x128xf32> to vector<8x32xf32>
    %419 = arith.negf %418 : vector<8x32xf32>
    %420 = math.exp %419 : vector<8x32xf32>
    %cst_96 = arith.constant 1.000000e+00 : f32
    %421 = vector.broadcast %cst_96 : f32 to vector<8x32xf32>
    %422 = arith.addf %421, %420 : vector<8x32xf32>
    %423 = arith.divf %421, %422 : vector<8x32xf32>
    %424 = arith.mulf %415, %397 : vector<8x32xf32>
    %425 = arith.mulf %409, %417 : vector<8x32xf32>
    %426 = arith.addf %424, %425 : vector<8x32xf32>
    %427 = math.tanh %426 : vector<8x32xf32>
    %428 = arith.mulf %423, %427 : vector<8x32xf32>
    %429 = vector.extract_strided_slice %281 {offsets = [5, 0, 0], sizes = [1, 8, 128], strides = [1, 1, 1]} : vector<8x8x128xf32> to vector<1x8x128xf32>
    %430 = vector.shape_cast %429 : vector<1x8x128xf32> to vector<8x128xf32>
    %cst_97 = arith.constant dense<0.000000e+00> : vector<8x128xf32>
    %431 = tpu.matmul %428, %274, %cst_97 {dimension_numbers = #tpu.dot_dimension_numbers<[1], [0], [0], [1], [0, 0, 1, 1], [], []>} : vector<8x32xf32>, vector<32x128xf32>, vector<8x128xf32> -> vector<8x128xf32>
    %432 = arith.addf %430, %431 : vector<8x128xf32>
    %433 = vector.extract_strided_slice %432 {offsets = [0, 0], sizes = [8, 32], strides = [1, 1]} : vector<8x128xf32> to vector<8x32xf32>
    %434 = arith.negf %433 : vector<8x32xf32>
    %435 = math.exp %434 : vector<8x32xf32>
    %cst_98 = arith.constant 1.000000e+00 : f32
    %436 = vector.broadcast %cst_98 : f32 to vector<8x32xf32>
    %437 = arith.addf %436, %435 : vector<8x32xf32>
    %438 = arith.divf %436, %437 : vector<8x32xf32>
    %439 = vector.extract_strided_slice %432 {offsets = [0, 32], sizes = [8, 32], strides = [1, 1]} : vector<8x128xf32> to vector<8x32xf32>
    %440 = arith.negf %439 : vector<8x32xf32>
    %441 = math.exp %440 : vector<8x32xf32>
    %cst_99 = arith.constant 1.000000e+00 : f32
    %442 = vector.broadcast %cst_99 : f32 to vector<8x32xf32>
    %443 = arith.addf %442, %441 : vector<8x32xf32>
    %444 = arith.divf %442, %443 : vector<8x32xf32>
    %445 = vector.extract_strided_slice %432 {offsets = [0, 64], sizes = [8, 32], strides = [1, 1]} : vector<8x128xf32> to vector<8x32xf32>
    %446 = math.tanh %445 : vector<8x32xf32>
    %447 = vector.extract_strided_slice %432 {offsets = [0, 96], sizes = [8, 32], strides = [1, 1]} : vector<8x128xf32> to vector<8x32xf32>
    %448 = arith.negf %447 : vector<8x32xf32>
    %449 = math.exp %448 : vector<8x32xf32>
    %cst_100 = arith.constant 1.000000e+00 : f32
    %450 = vector.broadcast %cst_100 : f32 to vector<8x32xf32>
    %451 = arith.addf %450, %449 : vector<8x32xf32>
    %452 = arith.divf %450, %451 : vector<8x32xf32>
    %453 = arith.mulf %444, %426 : vector<8x32xf32>
    %454 = arith.mulf %438, %446 : vector<8x32xf32>
    %455 = arith.addf %453, %454 : vector<8x32xf32>
    %456 = math.tanh %455 : vector<8x32xf32>
    %457 = arith.mulf %452, %456 : vector<8x32xf32>
    %458 = vector.extract_strided_slice %281 {offsets = [6, 0, 0], sizes = [1, 8, 128], strides = [1, 1, 1]} : vector<8x8x128xf32> to vector<1x8x128xf32>
    %459 = vector.shape_cast %458 : vector<1x8x128xf32> to vector<8x128xf32>
    %cst_101 = arith.constant dense<0.000000e+00> : vector<8x128xf32>
    %460 = tpu.matmul %457, %274, %cst_101 {dimension_numbers = #tpu.dot_dimension_numbers<[1], [0], [0], [1], [0, 0, 1, 1], [], []>} : vector<8x32xf32>, vector<32x128xf32>, vector<8x128xf32> -> vector<8x128xf32>
    %461 = arith.addf %459, %460 : vector<8x128xf32>
    %462 = vector.extract_strided_slice %461 {offsets = [0, 0], sizes = [8, 32], strides = [1, 1]} : vector<8x128xf32> to vector<8x32xf32>
    %463 = arith.negf %462 : vector<8x32xf32>
    %464 = math.exp %463 : vector<8x32xf32>
    %cst_102 = arith.constant 1.000000e+00 : f32
    %465 = vector.broadcast %cst_102 : f32 to vector<8x32xf32>
    %466 = arith.addf %465, %464 : vector<8x32xf32>
    %467 = arith.divf %465, %466 : vector<8x32xf32>
    %468 = vector.extract_strided_slice %461 {offsets = [0, 32], sizes = [8, 32], strides = [1, 1]} : vector<8x128xf32> to vector<8x32xf32>
    %469 = arith.negf %468 : vector<8x32xf32>
    %470 = math.exp %469 : vector<8x32xf32>
    %cst_103 = arith.constant 1.000000e+00 : f32
    %471 = vector.broadcast %cst_103 : f32 to vector<8x32xf32>
    %472 = arith.addf %471, %470 : vector<8x32xf32>
    %473 = arith.divf %471, %472 : vector<8x32xf32>
    %474 = vector.extract_strided_slice %461 {offsets = [0, 64], sizes = [8, 32], strides = [1, 1]} : vector<8x128xf32> to vector<8x32xf32>
    %475 = math.tanh %474 : vector<8x32xf32>
    %476 = vector.extract_strided_slice %461 {offsets = [0, 96], sizes = [8, 32], strides = [1, 1]} : vector<8x128xf32> to vector<8x32xf32>
    %477 = arith.negf %476 : vector<8x32xf32>
    %478 = math.exp %477 : vector<8x32xf32>
    %cst_104 = arith.constant 1.000000e+00 : f32
    %479 = vector.broadcast %cst_104 : f32 to vector<8x32xf32>
    %480 = arith.addf %479, %478 : vector<8x32xf32>
    %481 = arith.divf %479, %480 : vector<8x32xf32>
    %482 = arith.mulf %473, %455 : vector<8x32xf32>
    %483 = arith.mulf %467, %475 : vector<8x32xf32>
    %484 = arith.addf %482, %483 : vector<8x32xf32>
    %485 = math.tanh %484 : vector<8x32xf32>
    %486 = arith.mulf %481, %485 : vector<8x32xf32>
    %487 = vector.extract_strided_slice %281 {offsets = [7, 0, 0], sizes = [1, 8, 128], strides = [1, 1, 1]} : vector<8x8x128xf32> to vector<1x8x128xf32>
    %488 = vector.shape_cast %487 : vector<1x8x128xf32> to vector<8x128xf32>
    %cst_105 = arith.constant dense<0.000000e+00> : vector<8x128xf32>
    %489 = tpu.matmul %486, %274, %cst_105 {dimension_numbers = #tpu.dot_dimension_numbers<[1], [0], [0], [1], [0, 0, 1, 1], [], []>} : vector<8x32xf32>, vector<32x128xf32>, vector<8x128xf32> -> vector<8x128xf32>
    %490 = arith.addf %488, %489 : vector<8x128xf32>
    %491 = vector.extract_strided_slice %490 {offsets = [0, 0], sizes = [8, 32], strides = [1, 1]} : vector<8x128xf32> to vector<8x32xf32>
    %492 = arith.negf %491 : vector<8x32xf32>
    %493 = math.exp %492 : vector<8x32xf32>
    %cst_106 = arith.constant 1.000000e+00 : f32
    %494 = vector.broadcast %cst_106 : f32 to vector<8x32xf32>
    %495 = arith.addf %494, %493 : vector<8x32xf32>
    %496 = arith.divf %494, %495 : vector<8x32xf32>
    %497 = vector.extract_strided_slice %490 {offsets = [0, 32], sizes = [8, 32], strides = [1, 1]} : vector<8x128xf32> to vector<8x32xf32>
    %498 = arith.negf %497 : vector<8x32xf32>
    %499 = math.exp %498 : vector<8x32xf32>
    %cst_107 = arith.constant 1.000000e+00 : f32
    %500 = vector.broadcast %cst_107 : f32 to vector<8x32xf32>
    %501 = arith.addf %500, %499 : vector<8x32xf32>
    %502 = arith.divf %500, %501 : vector<8x32xf32>
    %503 = vector.extract_strided_slice %490 {offsets = [0, 64], sizes = [8, 32], strides = [1, 1]} : vector<8x128xf32> to vector<8x32xf32>
    %504 = math.tanh %503 : vector<8x32xf32>
    %505 = vector.extract_strided_slice %490 {offsets = [0, 96], sizes = [8, 32], strides = [1, 1]} : vector<8x128xf32> to vector<8x32xf32>
    %506 = arith.negf %505 : vector<8x32xf32>
    %507 = math.exp %506 : vector<8x32xf32>
    %cst_108 = arith.constant 1.000000e+00 : f32
    %508 = vector.broadcast %cst_108 : f32 to vector<8x32xf32>
    %509 = arith.addf %508, %507 : vector<8x32xf32>
    %510 = arith.divf %508, %509 : vector<8x32xf32>
    %511 = arith.mulf %502, %484 : vector<8x32xf32>
    %512 = arith.mulf %496, %504 : vector<8x32xf32>
    %513 = arith.addf %511, %512 : vector<8x32xf32>
    %514 = math.tanh %513 : vector<8x32xf32>
    %515 = arith.mulf %510, %514 : vector<8x32xf32>
    %c1_109 = arith.constant 1 : index
    %c0_110 = arith.constant 0 : index
    %c0_111 = arith.constant 0 : index
    %516 = vector.load %arg8[%c1_109, %c0_110, %c0_111] : memref<2x8x32xf32, #tpu.memory_space<vmem>>, vector<1x8x32xf32>
    %517 = vector.shape_cast %516 : vector<1x8x32xf32> to vector<8x32xf32>
    %518 = vector.shape_cast %515 : vector<8x32xf32> to vector<1x8x32xf32>
    tpu.vector_store %arg8[%c1_109, %c0_110, %c0_111], %518 {strides = array<i32>} : memref<2x8x32xf32, #tpu.memory_space<vmem>>, vector<1x8x32xf32>,
    %c1_112 = arith.constant 1 : index
    %c0_113 = arith.constant 0 : index
    %c0_114 = arith.constant 0 : index
    %519 = vector.load %arg9[%c1_112, %c0_113, %c0_114] : memref<2x8x32xf32, #tpu.memory_space<vmem>>, vector<1x8x32xf32>
    %520 = vector.shape_cast %519 : vector<1x8x32xf32> to vector<8x32xf32>
    %521 = vector.shape_cast %513 : vector<8x32xf32> to vector<1x8x32xf32>
    tpu.vector_store %arg9[%c1_112, %c0_113, %c0_114], %521 {strides = array<i32>} : memref<2x8x32xf32, #tpu.memory_space<vmem>>, vector<1x8x32xf32>,
    return
  }
  func.func @transform_0(%arg0: i32) -> (i32, i32, i32) {
    %c0_i32 = arith.constant 0 : i32
    %c0_i32_0 = arith.constant 0 : i32
    %c0_i32_1 = arith.constant 0 : i32
    %c0_i32_2 = arith.constant 0 : i32
    return %c0_i32, %c0_i32_0, %c0_i32_1 : i32, i32, i32
  }
  func.func @transform_1(%arg0: i32) -> (i32, i32) {
    %c0_i32 = arith.constant 0 : i32
    %c0_i32_0 = arith.constant 0 : i32
    %c0_i32_1 = arith.constant 0 : i32
    return %c0_i32, %c0_i32_0 : i32, i32
  }
  func.func @transform_2(%arg0: i32) -> (i32, i32) {
    %c0_i32 = arith.constant 0 : i32
    %c0_i32_0 = arith.constant 0 : i32
    %c0_i32_1 = arith.constant 0 : i32
    return %c0_i32, %c0_i32_0 : i32, i32
  }
  func.func @transform_3(%arg0: i32) -> (i32, i32) {
    %c0_i32 = arith.constant 0 : i32
    %c0_i32_0 = arith.constant 0 : i32
    %c0_i32_1 = arith.constant 0 : i32
    return %c0_i32, %c0_i32_0 : i32, i32
  }
  func.func @transform_4(%arg0: i32) -> (i32, i32) {
    %c0_i32 = arith.constant 0 : i32
    %c0_i32_0 = arith.constant 0 : i32
    %c0_i32_1 = arith.constant 0 : i32
    return %c0_i32, %c0_i32_0 : i32, i32
  }
  func.func @transform_5(%arg0: i32) -> (i32, i32) {
    %c0_i32 = arith.constant 0 : i32
    %c0_i32_0 = arith.constant 0 : i32
    %c0_i32_1 = arith.constant 0 : i32
    return %c0_i32, %c0_i32_0 : i32, i32
  }
  func.func @transform_6(%arg0: i32) -> (i32, i32) {
    %c0_i32 = arith.constant 0 : i32
    %c0_i32_0 = arith.constant 0 : i32
    %c0_i32_1 = arith.constant 0 : i32
    return %c0_i32, %c0_i32_0 : i32, i32
  }
  func.func @transform_7(%arg0: i32) -> (i32, i32, i32) {
    %c0_i32 = arith.constant 0 : i32
    %c0_i32_0 = arith.constant 0 : i32
    %c0_i32_1 = arith.constant 0 : i32
    %c0_i32_2 = arith.constant 0 : i32
    return %c0_i32, %c0_i32_0, %c0_i32_1 : i32, i32, i32
  }
  func.func @transform_8(%arg0: i32) -> (i32, i32, i32) {
    %c0_i32 = arith.constant 0 : i32
    %c0_i32_0 = arith.constant 0 : i32
    %c0_i32_1 = arith.constant 0 : i32
    %c0_i32_2 = arith.constant 0 : i32
    return %c0_i32, %c0_i32_0, %c0_i32_1 : i32, i32, i32
  }
}

</mosaic_0001>

<llo_original>
// kernel: encoder_forward.1
$region0: #{encoder_forward.1}
  #allocation0 [shape = 'u32[]', space=smem, size = 0x4, offset = 0x4, fixed_abs, tag = 'smem constant byte address 0x4 - core index']
  #allocation1 [shape = 'u32[144,128]{1,0:T(1,128)}', space=vmem, size = 0x12000, scoped, tag = 'internal scratch']
  #allocation2 [shape = 'f32[8,8,32]{2,1,0:T(8,128)}', space=vmem, size = 0x8000, scoped, tag = 'scratch operand']
  %s0 = inlined_call_operand.vmem [shape: f32[8,8,32], index: 0, kind: input, shape index: {}]
  %s1 = inlined_call_operand.vmem [shape: f32[32,128], index: 1, kind: input, shape index: {}]
  %s2 = inlined_call_operand.vmem [shape: f32[32,128], index: 2, kind: input, shape index: {}]
  %s3 = inlined_call_operand.vmem [shape: f32[1,128], index: 3, kind: input, shape index: {}]
  %s4 = inlined_call_operand.vmem [shape: f32[32,128], index: 4, kind: input, shape index: {}]
  %s5 = inlined_call_operand.vmem [shape: f32[32,128], index: 5, kind: input, shape index: {}]
  %s6 = inlined_call_operand.vmem [shape: f32[1,128], index: 6, kind: input, shape index: {}]
  %s7 = inlined_call_operand.vmem [shape: f32[2,8,32], index: 7, kind: output, shape index: {0}]
  %s8 = inlined_call_operand.vmem [shape: f32[2,8,32], index: 8, kind: output, shape index: {1}]
  %9 = xla_tuple %s7, %s8
  %s10 = sld [smem:[#allocation0]]
  $region46: #{encoder_forward.1} parent=0
    _
  %s12 = ssub.s32 1, %s10
  %s13 = scalar_select 0, %s12, %s10
  // Predicated region
  $region2: #{encoder_forward.1} parent=0 // pred_check
    _
  $region3: #{encoder_forward.1} parent=0 // pred_check_branch
    %15 = sbr.rel (0) target = $region5
  $region4: #{encoder_forward.1} parent=0 // pred_region
    _
  $region5: #{encoder_forward.1} parent=0 // pred_fallthru
    _
  // Predicated region
  $region6: #{encoder_forward.1} parent=0 // pred_check
    _
  $region7: #{encoder_forward.1} parent=0 // pred_check_branch
    %17 = sbr.rel (0) target = $region9
  $region8: #{encoder_forward.1} parent=0 // pred_region
    _
  $region9: #{encoder_forward.1} parent=0 // pred_fallthru
    _
  // Predicated region
  $region10: #{encoder_forward.1} parent=0 // pred_check
    _
  $region11: #{encoder_forward.1} parent=0 // pred_check_branch
    %19 = sbr.rel (0) target = $region13
  $region12: #{encoder_forward.1} parent=0 // pred_region
    _
  $region13: #{encoder_forward.1} parent=0 // pred_fallthru
    _
  // Predicated region
  $region14: #{encoder_forward.1} parent=0 // pred_check
    _
  $region15: #{encoder_forward.1} parent=0 // pred_check_branch
    %21 = sbr.rel (0) target = $region17
  $region16: #{encoder_forward.1} parent=0 // pred_region
    _
  $region17: #{encoder_forward.1} parent=0 // pred_fallthru
    _
  // Predicated region
  $region18: #{encoder_forward.1} parent=0 // pred_check
    _
  $region19: #{encoder_forward.1} parent=0 // pred_check_branch
    %23 = sbr.rel (0) target = $region21
  $region20: #{encoder_forward.1} parent=0 // pred_region
    _
  $region21: #{encoder_forward.1} parent=0 // pred_fallthru
    _
  // Predicated region
  $region22: #{encoder_forward.1} parent=0 // pred_check
    _
  $region23: #{encoder_forward.1} parent=0 // pred_check_branch
    %25 = sbr.rel (0) target = $region25
  $region24: #{encoder_forward.1} parent=0 // pred_region
    _
  $region25: #{encoder_forward.1} parent=0 // pred_fallthru
    _
  // Predicated region
  $region26: #{encoder_forward.1} parent=0 // pred_check
    _
  $region27: #{encoder_forward.1} parent=0 // pred_check_branch
    %27 = sbr.rel (0) target = $region29
  $region28: #{encoder_forward.1} parent=0 // pred_region
    _
  $region29: #{encoder_forward.1} parent=0 // pred_fallthru
    _
  %v28 = vld [vmem:[%s1] sm:$0xff]
  %v29 = vld [vmem:[%s1 + $0x8] sm:$0xff]
  %v30 = vld [vmem:[%s1 + $0x10] sm:$0xff]
  %v31 = vld [vmem:[%s1 + $0x18] sm:$0xff]
  %v32 = vld [vmem:[%s2] sm:$0xff]
  %v33 = vld [vmem:[%s2 + $0x8] sm:$0xff]
  %v34 = vld [vmem:[%s2 + $0x10] sm:$0xff]
  %v35 = vld [vmem:[%s2 + $0x18] sm:$0xff]
  %v36 = vld [vmem:[%s3] sm:$0x1]
  %v37 = vld [vmem:[%s0] sm:$0xff]
  %v38 = vld [vmem:[%s0 + $0x8] sm:$0xff]
  %v39 = vld [vmem:[%s0 + $0x10] sm:$0xff]
  %v40 = vld [vmem:[%s0 + $0x18] sm:$0xff]
  %v41 = vld [vmem:[%s0 + $0x20] sm:$0xff]
  %v42 = vld [vmem:[%s0 + $0x28] sm:$0xff]
  %v43 = vld [vmem:[%s0 + $0x30] sm:$0xff]
  %v44 = vld [vmem:[%s0 + $0x38] sm:$0xff]
  %v46 = vlaneseq
  %v47 = vshrl.u32 %v46, 7
  %v48 = vsub.s32 0, %v47
  %v49 = vrot.slane %v36, %v48
  %vm51 = vcmask 261120
  %v53 = vsel %vm51, %v37, 0
  %v56 = vsel %vm51, %v38, 0
  %v59 = vsel %vm51, %v39, 0
  %v62 = vsel %vm51, %v40, 0
  %v65 = vsel %vm51, %v41, 0
  %v68 = vsel %vm51, %v42, 0
  %v71 = vsel %vm51, %v43, 0
  %v74 = vsel %vm51, %v44, 0
  %76 = vmatprep.subr.mxu0 0.0
  %77 = vmatpush1.msra.mxu0 0.0
  %78 = vmatprep.subr.mxu0 0.0
  %79 = vmatpush1.msra.mxu0 0.0
  %80 = vmatprep.subr.mxu0 0.0
  %81 = vmatpush1.msra.mxu0 0.0
  %82 = vmatprep.subr.mxu0 0.0
  %83 = vmatpush1.msra.mxu0 0.0
  %84 = vmatprep.subr.mxu0 0.0
  %85 = vmatpush1.msra.mxu0 0.0
  %86 = vmatprep.subr.mxu0 0.0
  %87 = vmatpush1.msra.mxu0 0.0
  %88 = vmatprep.subr.mxu0 0.0
  %89 = vmatpush1.msra.mxu0 0.0
  %90 = vmatprep.subr.mxu0 0.0
  %91 = vmatpush1.msra.mxu0 0.0
  %92 = vmatprep.subr.mxu0 0.0
  %93 = vmatpush1.msra.mxu0 0.0
  %94 = vmatprep.subr.mxu0 0.0
  %95 = vmatpush1.msra.mxu0 0.0
  %96 = vmatprep.subr.mxu0 0.0
  %97 = vmatpush1.msra.mxu0 0.0
  %98 = vmatprep.subr.mxu0 0.0
  %99 = vmatpush1.msra.mxu0 0.0
  %100 = vmatprep.subr.mxu0 0.0
  %101 = vmatpush1.msra.mxu0 %v31
  %102 = vmatprep.subr.mxu0 0.0
  %103 = vmatpush1.msra.mxu0 %v30
  %104 = vmatprep.subr.mxu0 0.0
  %105 = vmatpush1.msra.mxu0 %v29
  %106 = vmatprep.subr.mxu0 0.0
  %107 = vmatpush1.msra.mxu0 %v28
  %108 = vmatprep.subr.mxu0 0.0
  %109 = vmatpush2.msra.mxu0 0.0
  %110 = vmatprep.subr.mxu0 0.0
  %111 = vmatpush2.msra.mxu0 0.0
  %112 = vmatprep.subr.mxu0 0.0
  %113 = vmatpush2.msra.mxu0 0.0
  %114 = vmatprep.subr.mxu0 0.0
  %115 = vmatpush2.msra.mxu0 0.0
  %116 = vmatprep.subr.mxu0 0.0
  %117 = vmatpush2.msra.mxu0 0.0
  %118 = vmatprep.subr.mxu0 0.0
  %119 = vmatpush2.msra.mxu0 0.0
  %120 = vmatprep.subr.mxu0 0.0
  %121 = vmatpush2.msra.mxu0 0.0
  %122 = vmatprep.subr.mxu0 0.0
  %123 = vmatpush2.msra.mxu0 0.0
  %124 = vmatprep.subr.mxu0 0.0
  %125 = vmatpush2.msra.mxu0 0.0
  %126 = vmatprep.subr.mxu0 0.0
  %127 = vmatpush2.msra.mxu0 0.0
  %128 = vmatprep.subr.mxu0 0.0
  %129 = vmatpush2.msra.mxu0 0.0
  %130 = vmatprep.subr.mxu0 0.0
  %131 = vmatpush2.msra.mxu0 0.0
  %132 = vmatprep.subr.mxu0 0.0
  %133 = vmatpush2.msra.mxu0 0.0
  %134 = vmatprep.subr.mxu0 0.0
  %135 = vmatpush2.msra.mxu0 0.0
  %136 = vmatprep.subr.mxu0 0.0
  %137 = vmatpush2.msra.mxu0 0.0
  %138 = vmatprep.subr.mxu0 0.0
  %139 = vmatpush2.msra.mxu0 0.0
  %140 = vmatprep.mubr.f32.mxu0 0.0
  %141 = vmatmul.mubr.f32.gmra.mxu0 %v53
  %v142 = vpop.f32.mrf.mxu0
  %v143 = vadd.f32 %v49, %v142
  %v144 = vpop.f32.mrf.mxu0
  %145 = vmatprep.mubr.f32.mxu0 0.0
  %146 = vmatmul.mubr.f32.gmra.mxu0 %v56
  %v147 = vpop.f32.mrf.mxu0
  %v148 = vadd.f32 %v49, %v147
  %v149 = vpop.f32.mrf.mxu0
  %150 = vmatprep.mubr.f32.mxu0 0.0
  %151 = vmatmul.mubr.f32.gmra.mxu0 %v59
  %v152 = vpop.f32.mrf.mxu0
  %v153 = vadd.f32 %v49, %v152
  %v154 = vpop.f32.mrf.mxu0
  %155 = vmatprep.mubr.f32.mxu0 0.0
  %156 = vmatmul.mubr.f32.gmra.mxu0 %v62
  %v157 = vpop.f32.mrf.mxu0
  %v158 = vadd.f32 %v49, %v157
  %v159 = vpop.f32.mrf.mxu0
  %160 = vmatprep.mubr.f32.mxu0 0.0
  %161 = vmatmul.mubr.f32.gmra.mxu0 %v65
  %v162 = vpop.f32.mrf.mxu0
  %v163 = vadd.f32 %v49, %v162
  %v164 = vpop.f32.mrf.mxu0
  %165 = vmatprep.mubr.f32.mxu0 0.0
  %166 = vmatmul.mubr.f32.gmra.mxu0 %v68
  %v167 = vpop.f32.mrf.mxu0
  %v168 = vadd.f32 %v49, %v167
  %v169 = vpop.f32.mrf.mxu0
  %170 = vmatprep.mubr.f32.mxu0 0.0
  %171 = vmatmul.mubr.f32.gmra.mxu0 %v71
  %v172 = vpop.f32.mrf.mxu0
  %v173 = vadd.f32 %v49, %v172
  %v174 = vpop.f32.mrf.mxu0
  %175 = vmatprep.mubr.f32.mxu0 0.0
  %176 = vmatmul.mubr.f32.gmra.mxu0 %v74
  %v177 = vpop.f32.mrf.mxu0
  %v178 = vadd.f32 %v49, %v177
  %v179 = vpop.f32.mrf.mxu0
  %180 = vdwg.mxu0
  %v182 = vsel %vm51, 0.0, 0
  %184 = vmatprep.subr.mxu0 0.0
  %185 = vmatpush1.msra.mxu0 0.0
  %186 = vmatprep.subr.mxu0 0.0
  %187 = vmatpush1.msra.mxu0 0.0
  %188 = vmatprep.subr.mxu0 0.0
  %189 = vmatpush1.msra.mxu0 0.0
  %190 = vmatprep.subr.mxu0 0.0
  %191 = vmatpush1.msra.mxu0 0.0
  %192 = vmatprep.subr.mxu0 0.0
  %193 = vmatpush1.msra.mxu0 0.0
  %194 = vmatprep.subr.mxu0 0.0
  %195 = vmatpush1.msra.mxu0 0.0
  %196 = vmatprep.subr.mxu0 0.0
  %197 = vmatpush1.msra.mxu0 0.0
  %198 = vmatprep.subr.mxu0 0.0
  %199 = vmatpush1.msra.mxu0 0.0
  %200 = vmatprep.subr.mxu0 0.0
  %201 = vmatpush1.msra.mxu0 0.0
  %202 = vmatprep.subr.mxu0 0.0
  %203 = vmatpush1.msra.mxu0 0.0
  %204 = vmatprep.subr.mxu0 0.0
  %205 = vmatpush1.msra.mxu0 0.0
  %206 = vmatprep.subr.mxu0 0.0
  %207 = vmatpush1.msra.mxu0 0.0
  %208 = vmatprep.subr.mxu0 0.0
  %209 = vmatpush1.msra.mxu0 %v35
  %210 = vmatprep.subr.mxu0 0.0
  %211 = vmatpush1.msra.mxu0 %v34
  %212 = vmatprep.subr.mxu0 0.0
  %213 = vmatpush1.msra.mxu0 %v33
  %214 = vmatprep.subr.mxu0 0.0
  %215 = vmatpush1.msra.mxu0 %v32
  %216 = vmatprep.subr.mxu0 0.0
  %217 = vmatpush2.msra.mxu0 0.0
  %218 = vmatprep.subr.mxu0 0.0
  %219 = vmatpush2.msra.mxu0 0.0
  %220 = vmatprep.subr.mxu0 0.0
  %221 = vmatpush2.msra.mxu0 0.0
  %222 = vmatprep.subr.mxu0 0.0
  %223 = vmatpush2.msra.mxu0 0.0
  %224 = vmatprep.subr.mxu0 0.0
  %225 = vmatpush2.msra.mxu0 0.0
  %226 = vmatprep.subr.mxu0 0.0
  %227 = vmatpush2.msra.mxu0 0.0
  %228 = vmatprep.subr.mxu0 0.0
  %229 = vmatpush2.msra.mxu0 0.0
  %230 = vmatprep.subr.mxu0 0.0
  %231 = vmatpush2.msra.mxu0 0.0
  %232 = vmatprep.subr.mxu0 0.0
  %233 = vmatpush2.msra.mxu0 0.0
  %234 = vmatprep.subr.mxu0 0.0
  %235 = vmatpush2.msra.mxu0 0.0
  %236 = vmatprep.subr.mxu0 0.0
  %237 = vmatpush2.msra.mxu0 0.0
  %238 = vmatprep.subr.mxu0 0.0
  %239 = vmatpush2.msra.mxu0 0.0
  %240 = vmatprep.subr.mxu0 0.0
  %241 = vmatpush2.msra.mxu0 0.0
  %242 = vmatprep.subr.mxu0 0.0
  %243 = vmatpush2.msra.mxu0 0.0
  %244 = vmatprep.subr.mxu0 0.0
  %245 = vmatpush2.msra.mxu0 0.0
  %246 = vmatprep.subr.mxu0 0.0
  %247 = vmatpush2.msra.mxu0 0.0
  %248 = vmatprep.mubr.f32.mxu0 0.0
  %249 = vmatmul.mubr.f32.gmra.mxu0 %v182
  %v250 = vpop.f32.mrf.mxu0
  %v251 = vadd.f32 0.0, %v250
  %v252 = vpop.f32.mrf.mxu0
  %253 = vdwg.mxu0
  %v254 = vadd.f32 %v143, %v251
  %v255 = vxor.u32 %v254, 2147483648
  %v256 = vmul.f32 %v255, 1.442695
  %v257 = vpow.pop %v256
  %v258 = vadd.f32 %v257, 1.0
  %v259 = vrcp.pop %v258
  %v260 = vmul.f32 1.0, %v259
  %v261 = vtanh.pop %v254
  %v262 = vmul.f32 %v260, 0.0
  %264 = vrot.lane.b32.xlu0 %v261, 64
  %v265 = vpop.permute.xlu0 %264
  %v267 = vmul.f32 %v260, %v265
  %269 = vrot.lane.b32.xlu0 %v267, 32
  %v270 = vpop.permute.xlu0 %269
  %v272 = vadd.f32 %v262, %v270
  %v273 = vtanh.pop %v272
  %275 = vrot.lane.b32.xlu0 %v273, 64
  %v276 = vpop.permute.xlu0 %275
  %v278 = vmul.f32 %v260, %v276
  %280 = vrot.lane.b32.xlu0 %v278, 32
  %v281 = vpop.permute.xlu0 %280
  %283 = vst.msk [vmem:[#allocation2] sm:$0xff] %vm51, %v281
  %v284 = vsel %vm51, %v281, 0
  %286 = vmatprep.subr.mxu0 0.0
  %287 = vmatpush1.msra.mxu0 0.0
  %288 = vmatprep.subr.mxu0 0.0
  %289 = vmatpush1.msra.mxu0 0.0
  %290 = vmatprep.subr.mxu0 0.0
  %291 = vmatpush1.msra.mxu0 0.0
  %292 = vmatprep.subr.mxu0 0.0
  %293 = vmatpush1.msra.mxu0 0.0
  %294 = vmatprep.subr.mxu0 0.0
  %295 = vmatpush1.msra.mxu0 0.0
  %296 = vmatprep.subr.mxu0 0.0
  %297 = vmatpush1.msra.mxu0 0.0
  %298 = vmatprep.subr.mxu0 0.0
  %299 = vmatpush1.msra.mxu0 0.0
  %300 = vmatprep.subr.mxu0 0.0
  %301 = vmatpush1.msra.mxu0 0.0
  %302 = vmatprep.subr.mxu0 0.0
  %303 = vmatpush1.msra.mxu0 0.0
  %304 = vmatprep.subr.mxu0 0.0
  %305 = vmatpush1.msra.mxu0 0.0
  %306 = vmatprep.subr.mxu0 0.0
  %307 = vmatpush1.msra.mxu0 0.0
  %308 = vmatprep.subr.mxu0 0.0
  %309 = vmatpush1.msra.mxu0 0.0
  %310 = vmatprep.subr.mxu0 0.0
  %311 = vmatpush1.msra.mxu0 %v35
  %312 = vmatprep.subr.mxu0 0.0
  %313 = vmatpush1.msra.mxu0 %v34
  %314 = vmatprep.subr.mxu0 0.0
  %315 = vmatpush1.msra.mxu0 %v33
  %316 = vmatprep.subr.mxu0 0.0
  %317 = vmatpush1.msra.mxu0 %v32
  %318 = vmatprep.subr.mxu0 0.0
  %319 = vmatpush2.msra.mxu0 0.0
  %320 = vmatprep.subr.mxu0 0.0
  %321 = vmatpush2.msra.mxu0 0.0
  %322 = vmatprep.subr.mxu0 0.0
  %323 = vmatpush2.msra.mxu0 0.0
  %324 = vmatprep.subr.mxu0 0.0
  %325 = vmatpush2.msra.mxu0 0.0
  %326 = vmatprep.subr.mxu0 0.0
  %327 = vmatpush2.msra.mxu0 0.0
  %328 = vmatprep.subr.mxu0 0.0
  %329 = vmatpush2.msra.mxu0 0.0
  %330 = vmatprep.subr.mxu0 0.0
  %331 = vmatpush2.msra.mxu0 0.0
  %332 = vmatprep.subr.mxu0 0.0
  %333 = vmatpush2.msra.mxu0 0.0
  %334 = vmatprep.subr.mxu0 0.0
  %335 = vmatpush2.msra.mxu0 0.0
  %336 = vmatprep.subr.mxu0 0.0
  %337 = vmatpush2.msra.mxu0 0.0
  %338 = vmatprep.subr.mxu0 0.0
  %339 = vmatpush2.msra.mxu0 0.0
  %340 = vmatprep.subr.mxu0 0.0
  %341 = vmatpush2.msra.mxu0 0.0
  %342 = vmatprep.subr.mxu0 0.0
  %343 = vmatpush2.msra.mxu0 0.0
  %344 = vmatprep.subr.mxu0 0.0
  %345 = vmatpush2.msra.mxu0 0.0
  %346 = vmatprep.subr.mxu0 0.0
  %347 = vmatpush2.msra.mxu0 0.0
  %348 = vmatprep.subr.mxu0 0.0
  %349 = vmatpush2.msra.mxu0 0.0
  %350 = vmatprep.mubr.f32.mxu0 0.0
  %351 = vmatmul.mubr.f32.gmra.mxu0 %v284
  %v352 = vpop.f32.mrf.mxu0
  %v353 = vadd.f32 0.0, %v352
  %v354 = vpop.f32.mrf.mxu0
  %355 = vdwg.mxu0
  %v356 = vadd.f32 %v148, %v353
  %v357 = vxor.u32 %v356, 2147483648
  %v358 = vmul.f32 %v357, 1.442695
  %v359 = vpow.pop %v358
  %v360 = vadd.f32 %v359, 1.0
  %v361 = vrcp.pop %v360
  %v362 = vmul.f32 1.0, %v361
  %v363 = vtanh.pop %v356
  %v364 = vmul.f32 %v362, %v272
  %366 = vrot.lane.b32.xlu0 %v363, 64
  %v367 = vpop.permute.xlu0 %366
  %v369 = vmul.f32 %v362, %v367
  %371 = vrot.lane.b32.xlu0 %v369, 32
  %v372 = vpop.permute.xlu0 %371
  %v374 = vadd.f32 %v364, %v372
  %v375 = vtanh.pop %v374
  %377 = vrot.lane.b32.xlu0 %v375, 64
  %v378 = vpop.permute.xlu0 %377
  %v380 = vmul.f32 %v362, %v378
  %382 = vrot.lane.b32.xlu0 %v380, 32
  %v383 = vpop.permute.xlu0 %382
  %s385 = scalar_lea.vmem [#allocation2], 8
  %386 = vst.msk [vmem:[%s385] sm:$0xff] %vm51, %v383
  %v387 = vsel %vm51, %v383, 0
  %389 = vmatprep.subr.mxu0 0.0
  %390 = vmatpush1.msra.mxu0 0.0
  %391 = vmatprep.subr.mxu0 0.0
  %392 = vmatpush1.msra.mxu0 0.0
  %393 = vmatprep.subr.mxu0 0.0
  %394 = vmatpush1.msra.mxu0 0.0
  %395 = vmatprep.subr.mxu0 0.0
  %396 = vmatpush1.msra.mxu0 0.0
  %397 = vmatprep.subr.mxu0 0.0
  %398 = vmatpush1.msra.mxu0 0.0
  %399 = vmatprep.subr.mxu0 0.0
  %400 = vmatpush1.msra.mxu0 0.0
  %401 = vmatprep.subr.mxu0 0.0
  %402 = vmatpush1.msra.mxu0 0.0
  %403 = vmatprep.subr.mxu0 0.0
  %404 = vmatpush1.msra.mxu0 0.0
  %405 = vmatprep.subr.mxu0 0.0
  %406 = vmatpush1.msra.mxu0 0.0
  %407 = vmatprep.subr.mxu0 0.0
  %408 = vmatpush1.msra.mxu0 0.0
  %409 = vmatprep.subr.mxu0 0.0
  %410 = vmatpush1.msra.mxu0 0.0
  %411 = vmatprep.subr.mxu0 0.0
  %412 = vmatpush1.msra.mxu0 0.0
  %413 = vmatprep.subr.mxu0 0.0
  %414 = vmatpush1.msra.mxu0 %v35
  %415 = vmatprep.subr.mxu0 0.0
  %416 = vmatpush1.msra.mxu0 %v34
  %417 = vmatprep.subr.mxu0 0.0
  %418 = vmatpush1.msra.mxu0 %v33
  %419 = vmatprep.subr.mxu0 0.0
  %420 = vmatpush1.msra.mxu0 %v32
  %421 = vmatprep.subr.mxu0 0.0
  %422 = vmatpush2.msra.mxu0 0.0
  %423 = vmatprep.subr.mxu0 0.0
  %424 = vmatpush2.msra.mxu0 0.0
  %425 = vmatprep.subr.mxu0 0.0
  %426 = vmatpush2.msra.mxu0 0.0
  %427 = vmatprep.subr.mxu0 0.0
  %428 = vmatpush2.msra.mxu0 0.0
  %429 = vmatprep.subr.mxu0 0.0
  %430 = vmatpush2.msra.mxu0 0.0
  %431 = vmatprep.subr.mxu0 0.0
  %432 = vmatpush2.msra.mxu0 0.0
  %433 = vmatprep.subr.mxu0 0.0
  %434 = vmatpush2.msra.mxu0 0.0
  %435 = vmatprep.subr.mxu0 0.0
  %436 = vmatpush2.msra.mxu0 0.0
  %437 = vmatprep.subr.mxu0 0.0
  %438 = vmatpush2.msra.mxu0 0.0
  %439 = vmatprep.subr.mxu0 0.0
  %440 = vmatpush2.msra.mxu0 0.0
  %441 = vmatprep.subr.mxu0 0.0
  %442 = vmatpush2.msra.mxu0 0.0
  %443 = vmatprep.subr.mxu0 0.0
  %444 = vmatpush2.msra.mxu0 0.0
  %445 = vmatprep.subr.mxu0 0.0
  %446 = vmatpush2.msra.mxu0 0.0
  %447 = vmatprep.subr.mxu0 0.0
  %448 = vmatpush2.msra.mxu0 0.0
  %449 = vmatprep.subr.mxu0 0.0
  %450 = vmatpush2.msra.mxu0 0.0
  %451 = vmatprep.subr.mxu0 0.0
  %452 = vmatpush2.msra.mxu0 0.0
  %453 = vmatprep.mubr.f32.mxu0 0.0
  %454 = vmatmul.mubr.f32.gmra.mxu0 %v387
  %v455 = vpop.f32.mrf.mxu0
  %v456 = vadd.f32 0.0, %v455
  %v457 = vpop.f32.mrf.mxu0
  %458 = vdwg.mxu0
  %v459 = vadd.f32 %v153, %v456
  %v460 = vxor.u32 %v459, 2147483648
  %v461 = vmul.f32 %v460, 1.442695
  %v462 = vpow.pop %v461
  %v463 = vadd.f32 %v462, 1.0
  %v464 = vrcp.pop %v463
  %v465 = vmul.f32 1.0, %v464
  %v466 = vtanh.pop %v459
  %v467 = vmul.f32 %v465, %v374
  %469 = vrot.lane.b32.xlu0 %v466, 64
  %v470 = vpop.permute.xlu0 %469
  %v472 = vmul.f32 %v465, %v470
  %474 = vrot.lane.b32.xlu0 %v472, 32
  %v475 = vpop.permute.xlu0 %474
  %v477 = vadd.f32 %v467, %v475
  %v478 = vtanh.pop %v477
  %480 = vrot.lane.b32.xlu0 %v478, 64
  %v481 = vpop.permute.xlu0 %480
  %v483 = vmul.f32 %v465, %v481
  %485 = vrot.lane.b32.xlu0 %v483, 32
  %v486 = vpop.permute.xlu0 %485
  %s488 = scalar_lea.vmem [#allocation2], 16
  %489 = vst.msk [vmem:[%s488] sm:$0xff] %vm51, %v486
  %v490 = vsel %vm51, %v486, 0
  %492 = vmatprep.subr.mxu0 0.0
  %493 = vmatpush1.msra.mxu0 0.0
  %494 = vmatprep.subr.mxu0 0.0
  %495 = vmatpush1.msra.mxu0 0.0
  %496 = vmatprep.subr.mxu0 0.0
  %497 = vmatpush1.msra.mxu0 0.0
  %498 = vmatprep.subr.mxu0 0.0
  %499 = vmatpush1.msra.mxu0 0.0
  %500 = vmatprep.subr.mxu0 0.0
  %501 = vmatpush1.msra.mxu0 0.0
  %502 = vmatprep.subr.mxu0 0.0
  %503 = vmatpush1.msra.mxu0 0.0
  %504 = vmatprep.subr.mxu0 0.0
  %505 = vmatpush1.msra.mxu0 0.0
  %506 = vmatprep.subr.mxu0 0.0
  %507 = vmatpush1.msra.mxu0 0.0
  %508 = vmatprep.subr.mxu0 0.0
  %509 = vmatpush1.msra.mxu0 0.0
  %510 = vmatprep.subr.mxu0 0.0
  %511 = vmatpush1.msra.mxu0 0.0
  %512 = vmatprep.subr.mxu0 0.0
  %513 = vmatpush1.msra.mxu0 0.0
  %514 = vmatprep.subr.mxu0 0.0
  %515 = vmatpush1.msra.mxu0 0.0
  %516 = vmatprep.subr.mxu0 0.0
  %517 = vmatpush1.msra.mxu0 %v35
  %518 = vmatprep.subr.mxu0 0.0
  %519 = vmatpush1.msra.mxu0 %v34
  %520 = vmatprep.subr.mxu0 0.0
  %521 = vmatpush1.msra.mxu0 %v33
  %522 = vmatprep.subr.mxu0 0.0
  %523 = vmatpush1.msra.mxu0 %v32
  %524 = vmatprep.subr.mxu0 0.0
  %525 = vmatpush2.msra.mxu0 0.0
  %526 = vmatprep.subr.mxu0 0.0
  %527 = vmatpush2.msra.mxu0 0.0
  %528 = vmatprep.subr.mxu0 0.0
  %529 = vmatpush2.msra.mxu0 0.0
  %530 = vmatprep.subr.mxu0 0.0
  %531 = vmatpush2.msra.mxu0 0.0
  %532 = vmatprep.subr.mxu0 0.0
  %533 = vmatpush2.msra.mxu0 0.0
  %534 = vmatprep.subr.mxu0 0.0
  %535 = vmatpush2.msra.mxu0 0.0
  %536 = vmatprep.subr.mxu0 0.0
  %537 = vmatpush2.msra.mxu0 0.0
  %538 = vmatprep.subr.mxu0 0.0
  %539 = vmatpush2.msra.mxu0 0.0
  %540 = vmatprep.subr.mxu0 0.0
  %541 = vmatpush2.msra.mxu0 0.0
  %542 = vmatprep.subr.mxu0 0.0
  %543 = vmatpush2.msra.mxu0 0.0
  %544 = vmatprep.subr.mxu0 0.0
  %545 = vmatpush2.msra.mxu0 0.0
  %546 = vmatprep.subr.mxu0 0.0
  %547 = vmatpush2.msra.mxu0 0.0
  %548 = vmatprep.subr.mxu0 0.0
  %549 = vmatpush2.msra.mxu0 0.0
  %550 = vmatprep.subr.mxu0 0.0
  %551 = vmatpush2.msra.mxu0 0.0
  %552 = vmatprep.subr.mxu0 0.0
  %553 = vmatpush2.msra.mxu0 0.0
  %554 = vmatprep.subr.mxu0 0.0
  %555 = vmatpush2.msra.mxu0 0.0
  %556 = vmatprep.mubr.f32.mxu0 0.0
  %557 = vmatmul.mubr.f32.gmra.mxu0 %v490
  %v558 = vpop.f32.mrf.mxu0
  %v559 = vadd.f32 0.0, %v558
  %v560 = vpop.f32.mrf.mxu0
  %561 = vdwg.mxu0
  %v562 = vadd.f32 %v158, %v559
  %v563 = vxor.u32 %v562, 2147483648
  %v564 = vmul.f32 %v563, 1.442695
  %v565 = vpow.pop %v564
  %v566 = vadd.f32 %v565, 1.0
  %v567 = vrcp.pop %v566
  %v568 = vmul.f32 1.0, %v567
  %v569 = vtanh.pop %v562
  %v570 = vmul.f32 %v568, %v477
  %572 = vrot.lane.b32.xlu0 %v569, 64
  %v573 = vpop.permute.xlu0 %572
  %v575 = vmul.f32 %v568, %v573
  %577 = vrot.lane.b32.xlu0 %v575, 32
  %v578 = vpop.permute.xlu0 %577
  %v580 = vadd.f32 %v570, %v578
  %v581 = vtanh.pop %v580
  %583 = vrot.lane.b32.xlu0 %v581, 64
  %v584 = vpop.permute.xlu0 %583
  %v586 = vmul.f32 %v568, %v584
  %588 = vrot.lane.b32.xlu0 %v586, 32
  %v589 = vpop.permute.xlu0 %588
  %s591 = scalar_lea.vmem [#allocation2], 24
  %592 = vst.msk [vmem:[%s591] sm:$0xff] %vm51, %v589
  %v593 = vsel %vm51, %v589, 0
  %595 = vmatprep.subr.mxu0 0.0
  %596 = vmatpush1.msra.mxu0 0.0
  %597 = vmatprep.subr.mxu0 0.0
  %598 = vmatpush1.msra.mxu0 0.0
  %599 = vmatprep.subr.mxu0 0.0
  %600 = vmatpush1.msra.mxu0 0.0
  %601 = vmatprep.subr.mxu0 0.0
  %602 = vmatpush1.msra.mxu0 0.0
  %603 = vmatprep.subr.mxu0 0.0
  %604 = vmatpush1.msra.mxu0 0.0
  %605 = vmatprep.subr.mxu0 0.0
  %606 = vmatpush1.msra.mxu0 0.0
  %607 = vmatprep.subr.mxu0 0.0
  %608 = vmatpush1.msra.mxu0 0.0
  %609 = vmatprep.subr.mxu0 0.0
  %610 = vmatpush1.msra.mxu0 0.0
  %611 = vmatprep.subr.mxu0 0.0
  %612 = vmatpush1.msra.mxu0 0.0
  %613 = vmatprep.subr.mxu0 0.0
  %614 = vmatpush1.msra.mxu0 0.0
  %615 = vmatprep.subr.mxu0 0.0
  %616 = vmatpush1.msra.mxu0 0.0
  %617 = vmatprep.subr.mxu0 0.0
  %618 = vmatpush1.msra.mxu0 0.0
  %619 = vmatprep.subr.mxu0 0.0
  %620 = vmatpush1.msra.mxu0 %v35
  %621 = vmatprep.subr.mxu0 0.0
  %622 = vmatpush1.msra.mxu0 %v34
  %623 = vmatprep.subr.mxu0 0.0
  %624 = vmatpush1.msra.mxu0 %v33
  %625 = vmatprep.subr.mxu0 0.0
  %626 = vmatpush1.msra.mxu0 %v32
  %627 = vmatprep.subr.mxu0 0.0
  %628 = vmatpush2.msra.mxu0 0.0
  %629 = vmatprep.subr.mxu0 0.0
  %630 = vmatpush2.msra.mxu0 0.0
  %631 = vmatprep.subr.mxu0 0.0
  %632 = vmatpush2.msra.mxu0 0.0
  %633 = vmatprep.subr.mxu0 0.0
  %634 = vmatpush2.msra.mxu0 0.0
  %635 = vmatprep.subr.mxu0 0.0
  %636 = vmatpush2.msra.mxu0 0.0
  %637 = vmatprep.subr.mxu0 0.0
  %638 = vmatpush2.msra.mxu0 0.0
  %639 = vmatprep.subr.mxu0 0.0
  %640 = vmatpush2.msra.mxu0 0.0
  %641 = vmatprep.subr.mxu0 0.0
  %642 = vmatpush2.msra.mxu0 0.0
  %643 = vmatprep.subr.mxu0 0.0
  %644 = vmatpush2.msra.mxu0 0.0
  %645 = vmatprep.subr.mxu0 0.0
  %646 = vmatpush2.msra.mxu0 0.0
  %647 = vmatprep.subr.mxu0 0.0
  %648 = vmatpush2.msra.mxu0 0.0
  %649 = vmatprep.subr.mxu0 0.0
  %650 = vmatpush2.msra.mxu0 0.0
  %651 = vmatprep.subr.mxu0 0.0
  %652 = vmatpush2.msra.mxu0 0.0
  %653 = vmatprep.subr.mxu0 0.0
  %654 = vmatpush2.msra.mxu0 0.0
  %655 = vmatprep.subr.mxu0 0.0
  %656 = vmatpush2.msra.mxu0 0.0
  %657 = vmatprep.subr.mxu0 0.0
  %658 = vmatpush2.msra.mxu0 0.0
  %659 = vmatprep.mubr.f32.mxu0 0.0
  %660 = vmatmul.mubr.f32.gmra.mxu0 %v593
  %v661 = vpop.f32.mrf.mxu0
  %v662 = vadd.f32 0.0, %v661
  %v663 = vpop.f32.mrf.mxu0
  %664 = vdwg.mxu0
  %v665 = vadd.f32 %v163, %v662
  %v666 = vxor.u32 %v665, 2147483648
  %v667 = vmul.f32 %v666, 1.442695
  %v668 = vpow.pop %v667
  %v669 = vadd.f32 %v668, 1.0
  %v670 = vrcp.pop %v669
  %v671 = vmul.f32 1.0, %v670
  %v672 = vtanh.pop %v665
  %v673 = vmul.f32 %v671, %v580
  %675 = vrot.lane.b32.xlu0 %v672, 64
  %v676 = vpop.permute.xlu0 %675
  %v678 = vmul.f32 %v671, %v676
  %680 = vrot.lane.b32.xlu0 %v678, 32
  %v681 = vpop.permute.xlu0 %680
  %v683 = vadd.f32 %v673, %v681
  %v684 = vtanh.pop %v683
  %686 = vrot.lane.b32.xlu0 %v684, 64
  %v687 = vpop.permute.xlu0 %686
  %v689 = vmul.f32 %v671, %v687
  %691 = vrot.lane.b32.xlu0 %v689, 32
  %v692 = vpop.permute.xlu0 %691
  %s694 = scalar_lea.vmem [#allocation2], 32
  %695 = vst.msk [vmem:[%s694] sm:$0xff] %vm51, %v692
  %v696 = vsel %vm51, %v692, 0
  %698 = vmatprep.subr.mxu0 0.0
  %699 = vmatpush1.msra.mxu0 0.0
  %700 = vmatprep.subr.mxu0 0.0
  %701 = vmatpush1.msra.mxu0 0.0
  %702 = vmatprep.subr.mxu0 0.0
  %703 = vmatpush1.msra.mxu0 0.0
  %704 = vmatprep.subr.mxu0 0.0
  %705 = vmatpush1.msra.mxu0 0.0
  %706 = vmatprep.subr.mxu0 0.0
  %707 = vmatpush1.msra.mxu0 0.0
  %708 = vmatprep.subr.mxu0 0.0
  %709 = vmatpush1.msra.mxu0 0.0
  %710 = vmatprep.subr.mxu0 0.0
  %711 = vmatpush1.msra.mxu0 0.0
  %712 = vmatprep.subr.mxu0 0.0
  %713 = vmatpush1.msra.mxu0 0.0
  %714 = vmatprep.subr.mxu0 0.0
  %715 = vmatpush1.msra.mxu0 0.0
  %716 = vmatprep.subr.mxu0 0.0
  %717 = vmatpush1.msra.mxu0 0.0
  %718 = vmatprep.subr.mxu0 0.0
  %719 = vmatpush1.msra.mxu0 0.0
  %720 = vmatprep.subr.mxu0 0.0
  %721 = vmatpush1.msra.mxu0 0.0
  %722 = vmatprep.subr.mxu0 0.0
  %723 = vmatpush1.msra.mxu0 %v35
  %724 = vmatprep.subr.mxu0 0.0
  %725 = vmatpush1.msra.mxu0 %v34
  %726 = vmatprep.subr.mxu0 0.0
  %727 = vmatpush1.msra.mxu0 %v33
  %728 = vmatprep.subr.mxu0 0.0
  %729 = vmatpush1.msra.mxu0 %v32
  %730 = vmatprep.subr.mxu0 0.0
  %731 = vmatpush2.msra.mxu0 0.0
  %732 = vmatprep.subr.mxu0 0.0
  %733 = vmatpush2.msra.mxu0 0.0
  %734 = vmatprep.subr.mxu0 0.0
  %735 = vmatpush2.msra.mxu0 0.0
  %736 = vmatprep.subr.mxu0 0.0
  %737 = vmatpush2.msra.mxu0 0.0
  %738 = vmatprep.subr.mxu0 0.0
  %739 = vmatpush2.msra.mxu0 0.0
  %740 = vmatprep.subr.mxu0 0.0
  %741 = vmatpush2.msra.mxu0 0.0
  %742 = vmatprep.subr.mxu0 0.0
  %743 = vmatpush2.msra.mxu0 0.0
  %744 = vmatprep.subr.mxu0 0.0
  %745 = vmatpush2.msra.mxu0 0.0
  %746 = vmatprep.subr.mxu0 0.0
  %747 = vmatpush2.msra.mxu0 0.0
  %748 = vmatprep.subr.mxu0 0.0
  %749 = vmatpush2.msra.mxu0 0.0
  %750 = vmatprep.subr.mxu0 0.0
  %751 = vmatpush2.msra.mxu0 0.0
  %752 = vmatprep.subr.mxu0 0.0
  %753 = vmatpush2.msra.mxu0 0.0
  %754 = vmatprep.subr.mxu0 0.0
  %755 = vmatpush2.msra.mxu0 0.0
  %756 = vmatprep.subr.mxu0 0.0
  %757 = vmatpush2.msra.mxu0 0.0
  %758 = vmatprep.subr.mxu0 0.0
  %759 = vmatpush2.msra.mxu0 0.0
  %760 = vmatprep.subr.mxu0 0.0
  %761 = vmatpush2.msra.mxu0 0.0
  %762 = vmatprep.mubr.f32.mxu0 0.0
  %763 = vmatmul.mubr.f32.gmra.mxu0 %v696
  %v764 = vpop.f32.mrf.mxu0
  %v765 = vadd.f32 0.0, %v764
  %v766 = vpop.f32.mrf.mxu0
  %767 = vdwg.mxu0
  %v768 = vadd.f32 %v168, %v765
  %v769 = vxor.u32 %v768, 2147483648
  %v770 = vmul.f32 %v769, 1.442695
  %v771 = vpow.pop %v770
  %v772 = vadd.f32 %v771, 1.0
  %v773 = vrcp.pop %v772
  %v774 = vmul.f32 1.0, %v773
  %v775 = vtanh.pop %v768
  %v776 = vmul.f32 %v774, %v683
  %778 = vrot.lane.b32.xlu0 %v775, 64
  %v779 = vpop.permute.xlu0 %778
  %v781 = vmul.f32 %v774, %v779
  %783 = vrot.lane.b32.xlu0 %v781, 32
  %v784 = vpop.permute.xlu0 %783
  %v786 = vadd.f32 %v776, %v784
  %v787 = vtanh.pop %v786
  %789 = vrot.lane.b32.xlu0 %v787, 64
  %v790 = vpop.permute.xlu0 %789
  %v792 = vmul.f32 %v774, %v790
  %794 = vrot.lane.b32.xlu0 %v792, 32
  %v795 = vpop.permute.xlu0 %794
  %s797 = scalar_lea.vmem [#allocation2], 40
  %798 = vst.msk [vmem:[%s797] sm:$0xff] %vm51, %v795
  %v799 = vsel %vm51, %v795, 0
  %801 = vmatprep.subr.mxu0 0.0
  %802 = vmatpush1.msra.mxu0 0.0
  %803 = vmatprep.subr.mxu0 0.0
  %804 = vmatpush1.msra.mxu0 0.0
  %805 = vmatprep.subr.mxu0 0.0
  %806 = vmatpush1.msra.mxu0 0.0
  %807 = vmatprep.subr.mxu0 0.0
  %808 = vmatpush1.msra.mxu0 0.0
  %809 = vmatprep.subr.mxu0 0.0
  %810 = vmatpush1.msra.mxu0 0.0
  %811 = vmatprep.subr.mxu0 0.0
  %812 = vmatpush1.msra.mxu0 0.0
  %813 = vmatprep.subr.mxu0 0.0
  %814 = vmatpush1.msra.mxu0 0.0
  %815 = vmatprep.subr.mxu0 0.0
  %816 = vmatpush1.msra.mxu0 0.0
  %817 = vmatprep.subr.mxu0 0.0
  %818 = vmatpush1.msra.mxu0 0.0
  %819 = vmatprep.subr.mxu0 0.0
  %820 = vmatpush1.msra.mxu0 0.0
  %821 = vmatprep.subr.mxu0 0.0
  %822 = vmatpush1.msra.mxu0 0.0
  %823 = vmatprep.subr.mxu0 0.0
  %824 = vmatpush1.msra.mxu0 0.0
  %825 = vmatprep.subr.mxu0 0.0
  %826 = vmatpush1.msra.mxu0 %v35
  %827 = vmatprep.subr.mxu0 0.0
  %828 = vmatpush1.msra.mxu0 %v34
  %829 = vmatprep.subr.mxu0 0.0
  %830 = vmatpush1.msra.mxu0 %v33
  %831 = vmatprep.subr.mxu0 0.0
  %832 = vmatpush1.msra.mxu0 %v32
  %833 = vmatprep.subr.mxu0 0.0
  %834 = vmatpush2.msra.mxu0 0.0
  %835 = vmatprep.subr.mxu0 0.0
  %836 = vmatpush2.msra.mxu0 0.0
  %837 = vmatprep.subr.mxu0 0.0
  %838 = vmatpush2.msra.mxu0 0.0
  %839 = vmatprep.subr.mxu0 0.0
  %840 = vmatpush2.msra.mxu0 0.0
  %841 = vmatprep.subr.mxu0 0.0
  %842 = vmatpush2.msra.mxu0 0.0
  %843 = vmatprep.subr.mxu0 0.0
  %844 = vmatpush2.msra.mxu0 0.0
  %845 = vmatprep.subr.mxu0 0.0
  %846 = vmatpush2.msra.mxu0 0.0
  %847 = vmatprep.subr.mxu0 0.0
  %848 = vmatpush2.msra.mxu0 0.0
  %849 = vmatprep.subr.mxu0 0.0
  %850 = vmatpush2.msra.mxu0 0.0
  %851 = vmatprep.subr.mxu0 0.0
  %852 = vmatpush2.msra.mxu0 0.0
  %853 = vmatprep.subr.mxu0 0.0
  %854 = vmatpush2.msra.mxu0 0.0
  %855 = vmatprep.subr.mxu0 0.0
  %856 = vmatpush2.msra.mxu0 0.0
  %857 = vmatprep.subr.mxu0 0.0
  %858 = vmatpush2.msra.mxu0 0.0
  %859 = vmatprep.subr.mxu0 0.0
  %860 = vmatpush2.msra.mxu0 0.0
  %861 = vmatprep.subr.mxu0 0.0
  %862 = vmatpush2.msra.mxu0 0.0
  %863 = vmatprep.subr.mxu0 0.0
  %864 = vmatpush2.msra.mxu0 0.0
  %865 = vmatprep.mubr.f32.mxu0 0.0
  %866 = vmatmul.mubr.f32.gmra.mxu0 %v799
  %v867 = vpop.f32.mrf.mxu0
  %v868 = vadd.f32 0.0, %v867
  %v869 = vpop.f32.mrf.mxu0
  %870 = vdwg.mxu0
  %v871 = vadd.f32 %v173, %v868
  %v872 = vxor.u32 %v871, 2147483648
  %v873 = vmul.f32 %v872, 1.442695
  %v874 = vpow.pop %v873
  %v875 = vadd.f32 %v874, 1.0
  %v876 = vrcp.pop %v875
  %v877 = vmul.f32 1.0, %v876
  %v878 = vtanh.pop %v871
  %v879 = vmul.f32 %v877, %v786
  %881 = vrot.lane.b32.xlu0 %v878, 64
  %v882 = vpop.permute.xlu0 %881
  %v884 = vmul.f32 %v877, %v882
  %886 = vrot.lane.b32.xlu0 %v884, 32
  %v887 = vpop.permute.xlu0 %886
  %v889 = vadd.f32 %v879, %v887
  %v890 = vtanh.pop %v889
  %892 = vrot.lane.b32.xlu0 %v890, 64
  %v893 = vpop.permute.xlu0 %892
  %v895 = vmul.f32 %v877, %v893
  %897 = vrot.lane.b32.xlu0 %v895, 32
  %v898 = vpop.permute.xlu0 %897
  %s900 = scalar_lea.vmem [#allocation2], 48
  %901 = vst.msk [vmem:[%s900] sm:$0xff] %vm51, %v898
  %v902 = vsel %vm51, %v898, 0
  %904 = vmatprep.subr.mxu0 0.0
  %905 = vmatpush1.msra.mxu0 0.0
  %906 = vmatprep.subr.mxu0 0.0
  %907 = vmatpush1.msra.mxu0 0.0
  %908 = vmatprep.subr.mxu0 0.0
  %909 = vmatpush1.msra.mxu0 0.0
  %910 = vmatprep.subr.mxu0 0.0
  %911 = vmatpush1.msra.mxu0 0.0
  %912 = vmatprep.subr.mxu0 0.0
  %913 = vmatpush1.msra.mxu0 0.0
  %914 = vmatprep.subr.mxu0 0.0
  %915 = vmatpush1.msra.mxu0 0.0
  %916 = vmatprep.subr.mxu0 0.0
  %917 = vmatpush1.msra.mxu0 0.0
  %918 = vmatprep.subr.mxu0 0.0
  %919 = vmatpush1.msra.mxu0 0.0
  %920 = vmatprep.subr.mxu0 0.0
  %921 = vmatpush1.msra.mxu0 0.0
  %922 = vmatprep.subr.mxu0 0.0
  %923 = vmatpush1.msra.mxu0 0.0
  %924 = vmatprep.subr.mxu0 0.0
  %925 = vmatpush1.msra.mxu0 0.0
  %926 = vmatprep.subr.mxu0 0.0
  %927 = vmatpush1.msra.mxu0 0.0
  %928 = vmatprep.subr.mxu0 0.0
  %929 = vmatpush1.msra.mxu0 %v35
  %930 = vmatprep.subr.mxu0 0.0
  %931 = vmatpush1.msra.mxu0 %v34
  %932 = vmatprep.subr.mxu0 0.0
  %933 = vmatpush1.msra.mxu0 %v33
  %934 = vmatprep.subr.mxu0 0.0
  %935 = vmatpush1.msra.mxu0 %v32
  %936 = vmatprep.subr.mxu0 0.0
  %937 = vmatpush2.msra.mxu0 0.0
  %938 = vmatprep.subr.mxu0 0.0
  %939 = vmatpush2.msra.mxu0 0.0
  %940 = vmatprep.subr.mxu0 0.0
  %941 = vmatpush2.msra.mxu0 0.0
  %942 = vmatprep.subr.mxu0 0.0
  %943 = vmatpush2.msra.mxu0 0.0
  %944 = vmatprep.subr.mxu0 0.0
  %945 = vmatpush2.msra.mxu0 0.0
  %946 = vmatprep.subr.mxu0 0.0
  %947 = vmatpush2.msra.mxu0 0.0
  %948 = vmatprep.subr.mxu0 0.0
  %949 = vmatpush2.msra.mxu0 0.0
  %950 = vmatprep.subr.mxu0 0.0
  %951 = vmatpush2.msra.mxu0 0.0
  %952 = vmatprep.subr.mxu0 0.0
  %953 = vmatpush2.msra.mxu0 0.0
  %954 = vmatprep.subr.mxu0 0.0
  %955 = vmatpush2.msra.mxu0 0.0
  %956 = vmatprep.subr.mxu0 0.0
  %957 = vmatpush2.msra.mxu0 0.0
  %958 = vmatprep.subr.mxu0 0.0
  %959 = vmatpush2.msra.mxu0 0.0
  %960 = vmatprep.subr.mxu0 0.0
  %961 = vmatpush2.msra.mxu0 0.0
  %962 = vmatprep.subr.mxu0 0.0
  %963 = vmatpush2.msra.mxu0 0.0
  %964 = vmatprep.subr.mxu0 0.0
  %965 = vmatpush2.msra.mxu0 0.0
  %966 = vmatprep.subr.mxu0 0.0
  %967 = vmatpush2.msra.mxu0 0.0
  %968 = vmatprep.mubr.f32.mxu0 0.0
  %969 = vmatmul.mubr.f32.gmra.mxu0 %v902
  %v970 = vpop.f32.mrf.mxu0
  %v971 = vadd.f32 0.0, %v970
  %v972 = vpop.f32.mrf.mxu0
  %973 = vdwg.mxu0
  %v974 = vadd.f32 %v178, %v971
  %v975 = vxor.u32 %v974, 2147483648
  %v976 = vmul.f32 %v975, 1.442695
  %v977 = vpow.pop %v976
  %v978 = vadd.f32 %v977, 1.0
  %v979 = vrcp.pop %v978
  %v980 = vmul.f32 1.0, %v979
  %v981 = vtanh.pop %v974
  %v982 = vmul.f32 %v980, %v889
  %984 = vrot.lane.b32.xlu0 %v981, 64
  %v985 = vpop.permute.xlu0 %984
  %v987 = vmul.f32 %v980, %v985
  %989 = vrot.lane.b32.xlu0 %v987, 32
  %v990 = vpop.permute.xlu0 %989
  %v992 = vadd.f32 %v982, %v990
  %v993 = vtanh.pop %v992
  %995 = vrot.lane.b32.xlu0 %v993, 64
  %v996 = vpop.permute.xlu0 %995
  %v998 = vmul.f32 %v980, %v996
  %1000 = vrot.lane.b32.xlu0 %v998, 32
  %v1001 = vpop.permute.xlu0 %1000
  %s1003 = scalar_lea.vmem [#allocation2], 56
  %1004 = vst.msk [vmem:[%s1003] sm:$0xff] %vm51, %v1001
  %1005 = vst.msk [vmem:[%s7] sm:$0xff] %vm51, %v1001
  %1007 = vrot.lane.b32.xlu0 %v992, 96
  %v1008 = vpop.permute.xlu0 %1007
  %1010 = vst.msk [vmem:[%s8] sm:$0xff] %vm51, %v1008
  %v1011 = vld [vmem:[%s4] sm:$0xff]
  %v1012 = vld [vmem:[%s4 + $0x8] sm:$0xff]
  %v1013 = vld [vmem:[%s4 + $0x10] sm:$0xff]
  %v1014 = vld [vmem:[%s4 + $0x18] sm:$0xff]
  %v1015 = vld [vmem:[%s5] sm:$0xff]
  %v1016 = vld [vmem:[%s5 + $0x8] sm:$0xff]
  %v1017 = vld [vmem:[%s5 + $0x10] sm:$0xff]
  %v1018 = vld [vmem:[%s5 + $0x18] sm:$0xff]
  %v1019 = vld [vmem:[%s6] sm:$0x1]
  %v1020 = vld [vmem:[#allocation2] sm:$0xff]
  %v1021 = vld [vmem:[#allocation2 + $0x8] sm:$0xff]
  %v1022 = vld [vmem:[#allocation2 + $0x10] sm:$0xff]
  %v1023 = vld [vmem:[#allocation2 + $0x18] sm:$0xff]
  %v1024 = vld [vmem:[#allocation2 + $0x20] sm:$0xff]
  %v1025 = vld [vmem:[#allocation2 + $0x28] sm:$0xff]
  %v1026 = vld [vmem:[#allocation2 + $0x30] sm:$0xff]
  %v1027 = vld [vmem:[#allocation2 + $0x38] sm:$0xff]
  %v1029 = vlaneseq
  %v1030 = vshrl.u32 %v1029, 7
  %v1031 = vsub.s32 0, %v1030
  %v1032 = vrot.slane %v1019, %v1031
  %v1035 = vsel %vm51, %v1020, 0
  %v1038 = vsel %vm51, %v1021, 0
  %v1041 = vsel %vm51, %v1022, 0
  %v1044 = vsel %vm51, %v1023, 0
  %v1047 = vsel %vm51, %v1024, 0
  %v1050 = vsel %vm51, %v1025, 0
  %v1053 = vsel %vm51, %v1026, 0
  %v1056 = vsel %vm51, %v1027, 0
  %1058 = vmatprep.subr.mxu0 0.0
  %1059 = vmatpush1.msra.mxu0 0.0
  %1060 = vmatprep.subr.mxu0 0.0
  %1061 = vmatpush1.msra.mxu0 0.0
  %1062 = vmatprep.subr.mxu0 0.0
  %1063 = vmatpush1.msra.mxu0 0.0
  %1064 = vmatprep.subr.mxu0 0.0
  %1065 = vmatpush1.msra.mxu0 0.0
  %1066 = vmatprep.subr.mxu0 0.0
  %1067 = vmatpush1.msra.mxu0 0.0
  %1068 = vmatprep.subr.mxu0 0.0
  %1069 = vmatpush1.msra.mxu0 0.0
  %1070 = vmatprep.subr.mxu0 0.0
  %1071 = vmatpush1.msra.mxu0 0.0
  %1072 = vmatprep.subr.mxu0 0.0
  %1073 = vmatpush1.msra.mxu0 0.0
  %1074 = vmatprep.subr.mxu0 0.0
  %1075 = vmatpush1.msra.mxu0 0.0
  %1076 = vmatprep.subr.mxu0 0.0
  %1077 = vmatpush1.msra.mxu0 0.0
  %1078 = vmatprep.subr.mxu0 0.0
  %1079 = vmatpush1.msra.mxu0 0.0
  %1080 = vmatprep.subr.mxu0 0.0
  %1081 = vmatpush1.msra.mxu0 0.0
  %1082 = vmatprep.subr.mxu0 0.0
  %1083 = vmatpush1.msra.mxu0 %v1014
  %1084 = vmatprep.subr.mxu0 0.0
  %1085 = vmatpush1.msra.mxu0 %v1013
  %1086 = vmatprep.subr.mxu0 0.0
  %1087 = vmatpush1.msra.mxu0 %v1012
  %1088 = vmatprep.subr.mxu0 0.0
  %1089 = vmatpush1.msra.mxu0 %v1011
  %1090 = vmatprep.subr.mxu0 0.0
  %1091 = vmatpush2.msra.mxu0 0.0
  %1092 = vmatprep.subr.mxu0 0.0
  %1093 = vmatpush2.msra.mxu0 0.0
  %1094 = vmatprep.subr.mxu0 0.0
  %1095 = vmatpush2.msra.mxu0 0.0
  %1096 = vmatprep.subr.mxu0 0.0
  %1097 = vmatpush2.msra.mxu0 0.0
  %1098 = vmatprep.subr.mxu0 0.0
  %1099 = vmatpush2.msra.mxu0 0.0
  %1100 = vmatprep.subr.mxu0 0.0
  %1101 = vmatpush2.msra.mxu0 0.0
  %1102 = vmatprep.subr.mxu0 0.0
  %1103 = vmatpush2.msra.mxu0 0.0
  %1104 = vmatprep.subr.mxu0 0.0
  %1105 = vmatpush2.msra.mxu0 0.0
  %1106 = vmatprep.subr.mxu0 0.0
  %1107 = vmatpush2.msra.mxu0 0.0
  %1108 = vmatprep.subr.mxu0 0.0
  %1109 = vmatpush2.msra.mxu0 0.0
  %1110 = vmatprep.subr.mxu0 0.0
  %1111 = vmatpush2.msra.mxu0 0.0
  %1112 = vmatprep.subr.mxu0 0.0
  %1113 = vmatpush2.msra.mxu0 0.0
  %1114 = vmatprep.subr.mxu0 0.0
  %1115 = vmatpush2.msra.mxu0 0.0
  %1116 = vmatprep.subr.mxu0 0.0
  %1117 = vmatpush2.msra.mxu0 0.0
  %1118 = vmatprep.subr.mxu0 0.0
  %1119 = vmatpush2.msra.mxu0 0.0
  %1120 = vmatprep.subr.mxu0 0.0
  %1121 = vmatpush2.msra.mxu0 0.0
  %1122 = vmatprep.mubr.f32.mxu0 0.0
  %1123 = vmatmul.mubr.f32.gmra.mxu0 %v1035
  %v1124 = vpop.f32.mrf.mxu0
  %v1125 = vadd.f32 %v1032, %v1124
  %v1126 = vpop.f32.mrf.mxu0
  %1127 = vmatprep.mubr.f32.mxu0 0.0
  %1128 = vmatmul.mubr.f32.gmra.mxu0 %v1038
  %v1129 = vpop.f32.mrf.mxu0
  %v1130 = vadd.f32 %v1032, %v1129
  %v1131 = vpop.f32.mrf.mxu0
  %1132 = vmatprep.mubr.f32.mxu0 0.0
  %1133 = vmatmul.mubr.f32.gmra.mxu0 %v1041
  %v1134 = vpop.f32.mrf.mxu0
  %v1135 = vadd.f32 %v1032, %v1134
  %v1136 = vpop.f32.mrf.mxu0
  %1137 = vmatprep.mubr.f32.mxu0 0.0
  %1138 = vmatmul.mubr.f32.gmra.mxu0 %v1044
  %v1139 = vpop.f32.mrf.mxu0
  %v1140 = vadd.f32 %v1032, %v1139
  %v1141 = vpop.f32.mrf.mxu0
  %1142 = vmatprep.mubr.f32.mxu0 0.0
  %1143 = vmatmul.mubr.f32.gmra.mxu0 %v1047
  %v1144 = vpop.f32.mrf.mxu0
  %v1145 = vadd.f32 %v1032, %v1144
  %v1146 = vpop.f32.mrf.mxu0
  %1147 = vmatprep.mubr.f32.mxu0 0.0
  %1148 = vmatmul.mubr.f32.gmra.mxu0 %v1050
  %v1149 = vpop.f32.mrf.mxu0
  %v1150 = vadd.f32 %v1032, %v1149
  %v1151 = vpop.f32.mrf.mxu0
  %1152 = vmatprep.mubr.f32.mxu0 0.0
  %1153 = vmatmul.mubr.f32.gmra.mxu0 %v1053
  %v1154 = vpop.f32.mrf.mxu0
  %v1155 = vadd.f32 %v1032, %v1154
  %v1156 = vpop.f32.mrf.mxu0
  %1157 = vmatprep.mubr.f32.mxu0 0.0
  %1158 = vmatmul.mubr.f32.gmra.mxu0 %v1056
  %v1159 = vpop.f32.mrf.mxu0
  %v1160 = vadd.f32 %v1032, %v1159
  %v1161 = vpop.f32.mrf.mxu0
  %1162 = vdwg.mxu0
  %1163 = vmatprep.subr.mxu0 0.0
  %1164 = vmatpush1.msra.mxu0 0.0
  %1165 = vmatprep.subr.mxu0 0.0
  %1166 = vmatpush1.msra.mxu0 0.0
  %1167 = vmatprep.subr.mxu0 0.0
  %1168 = vmatpush1.msra.mxu0 0.0
  %1169 = vmatprep.subr.mxu0 0.0
  %1170 = vmatpush1.msra.mxu0 0.0
  %1171 = vmatprep.subr.mxu0 0.0
  %1172 = vmatpush1.msra.mxu0 0.0
  %1173 = vmatprep.subr.mxu0 0.0
  %1174 = vmatpush1.msra.mxu0 0.0
  %1175 = vmatprep.subr.mxu0 0.0
  %1176 = vmatpush1.msra.mxu0 0.0
  %1177 = vmatprep.subr.mxu0 0.0
  %1178 = vmatpush1.msra.mxu0 0.0
  %1179 = vmatprep.subr.mxu0 0.0
  %1180 = vmatpush1.msra.mxu0 0.0
  %1181 = vmatprep.subr.mxu0 0.0
  %1182 = vmatpush1.msra.mxu0 0.0
  %1183 = vmatprep.subr.mxu0 0.0
  %1184 = vmatpush1.msra.mxu0 0.0
  %1185 = vmatprep.subr.mxu0 0.0
  %1186 = vmatpush1.msra.mxu0 0.0
  %1187 = vmatprep.subr.mxu0 0.0
  %1188 = vmatpush1.msra.mxu0 %v1018
  %1189 = vmatprep.subr.mxu0 0.0
  %1190 = vmatpush1.msra.mxu0 %v1017
  %1191 = vmatprep.subr.mxu0 0.0
  %1192 = vmatpush1.msra.mxu0 %v1016
  %1193 = vmatprep.subr.mxu0 0.0
  %1194 = vmatpush1.msra.mxu0 %v1015
  %1195 = vmatprep.subr.mxu0 0.0
  %1196 = vmatpush2.msra.mxu0 0.0
  %1197 = vmatprep.subr.mxu0 0.0
  %1198 = vmatpush2.msra.mxu0 0.0
  %1199 = vmatprep.subr.mxu0 0.0
  %1200 = vmatpush2.msra.mxu0 0.0
  %1201 = vmatprep.subr.mxu0 0.0
  %1202 = vmatpush2.msra.mxu0 0.0
  %1203 = vmatprep.subr.mxu0 0.0
  %1204 = vmatpush2.msra.mxu0 0.0
  %1205 = vmatprep.subr.mxu0 0.0
  %1206 = vmatpush2.msra.mxu0 0.0
  %1207 = vmatprep.subr.mxu0 0.0
  %1208 = vmatpush2.msra.mxu0 0.0
  %1209 = vmatprep.subr.mxu0 0.0
  %1210 = vmatpush2.msra.mxu0 0.0
  %1211 = vmatprep.subr.mxu0 0.0
  %1212 = vmatpush2.msra.mxu0 0.0
  %1213 = vmatprep.subr.mxu0 0.0
  %1214 = vmatpush2.msra.mxu0 0.0
  %1215 = vmatprep.subr.mxu0 0.0
  %1216 = vmatpush2.msra.mxu0 0.0
  %1217 = vmatprep.subr.mxu0 0.0
  %1218 = vmatpush2.msra.mxu0 0.0
  %1219 = vmatprep.subr.mxu0 0.0
  %1220 = vmatpush2.msra.mxu0 0.0
  %1221 = vmatprep.subr.mxu0 0.0
  %1222 = vmatpush2.msra.mxu0 0.0
  %1223 = vmatprep.subr.mxu0 0.0
  %1224 = vmatpush2.msra.mxu0 0.0
  %1225 = vmatprep.subr.mxu0 0.0
  %1226 = vmatpush2.msra.mxu0 0.0
  %1227 = vmatprep.mubr.f32.mxu0 0.0
  %1228 = vmatmul.mubr.f32.gmra.mxu0 %v182
  %v1229 = vpop.f32.mrf.mxu0
  %v1230 = vadd.f32 0.0, %v1229
  %v1231 = vpop.f32.mrf.mxu0
  %1232 = vdwg.mxu0
  %v1233 = vadd.f32 %v1125, %v1230
  %v1234 = vxor.u32 %v1233, 2147483648
  %v1235 = vmul.f32 %v1234, 1.442695
  %v1236 = vpow.pop %v1235
  %v1237 = vadd.f32 %v1236, 1.0
  %v1238 = vrcp.pop %v1237
  %v1239 = vmul.f32 1.0, %v1238
  %v1240 = vtanh.pop %v1233
  %v1241 = vmul.f32 %v1239, 0.0
  %1243 = vrot.lane.b32.xlu0 %v1240, 64
  %v1244 = vpop.permute.xlu0 %1243
  %v1246 = vmul.f32 %v1239, %v1244
  %1248 = vrot.lane.b32.xlu0 %v1246, 32
  %v1249 = vpop.permute.xlu0 %1248
  %v1251 = vadd.f32 %v1241, %v1249
  %v1252 = vtanh.pop %v1251
  %1254 = vrot.lane.b32.xlu0 %v1252, 64
  %v1255 = vpop.permute.xlu0 %1254
  %v1257 = vmul.f32 %v1239, %v1255
  %1259 = vrot.lane.b32.xlu0 %v1257, 32
  %v1260 = vpop.permute.xlu0 %1259
  %v1261 = vsel %vm51, %v1260, 0
  %1263 = vmatprep.subr.mxu0 0.0
  %1264 = vmatpush1.msra.mxu0 0.0
  %1265 = vmatprep.subr.mxu0 0.0
  %1266 = vmatpush1.msra.mxu0 0.0
  %1267 = vmatprep.subr.mxu0 0.0
  %1268 = vmatpush1.msra.mxu0 0.0
  %1269 = vmatprep.subr.mxu0 0.0
  %1270 = vmatpush1.msra.mxu0 0.0
  %1271 = vmatprep.subr.mxu0 0.0
  %1272 = vmatpush1.msra.mxu0 0.0
  %1273 = vmatprep.subr.mxu0 0.0
  %1274 = vmatpush1.msra.mxu0 0.0
  %1275 = vmatprep.subr.mxu0 0.0
  %1276 = vmatpush1.msra.mxu0 0.0
  %1277 = vmatprep.subr.mxu0 0.0
  %1278 = vmatpush1.msra.mxu0 0.0
  %1279 = vmatprep.subr.mxu0 0.0
  %1280 = vmatpush1.msra.mxu0 0.0
  %1281 = vmatprep.subr.mxu0 0.0
  %1282 = vmatpush1.msra.mxu0 0.0
  %1283 = vmatprep.subr.mxu0 0.0
  %1284 = vmatpush1.msra.mxu0 0.0
  %1285 = vmatprep.subr.mxu0 0.0
  %1286 = vmatpush1.msra.mxu0 0.0
  %1287 = vmatprep.subr.mxu0 0.0
  %1288 = vmatpush1.msra.mxu0 %v1018
  %1289 = vmatprep.subr.mxu0 0.0
  %1290 = vmatpush1.msra.mxu0 %v1017
  %1291 = vmatprep.subr.mxu0 0.0
  %1292 = vmatpush1.msra.mxu0 %v1016
  %1293 = vmatprep.subr.mxu0 0.0
  %1294 = vmatpush1.msra.mxu0 %v1015
  %1295 = vmatprep.subr.mxu0 0.0
  %1296 = vmatpush2.msra.mxu0 0.0
  %1297 = vmatprep.subr.mxu0 0.0
  %1298 = vmatpush2.msra.mxu0 0.0
  %1299 = vmatprep.subr.mxu0 0.0
  %1300 = vmatpush2.msra.mxu0 0.0
  %1301 = vmatprep.subr.mxu0 0.0
  %1302 = vmatpush2.msra.mxu0 0.0
  %1303 = vmatprep.subr.mxu0 0.0
  %1304 = vmatpush2.msra.mxu0 0.0
  %1305 = vmatprep.subr.mxu0 0.0
  %1306 = vmatpush2.msra.mxu0 0.0
  %1307 = vmatprep.subr.mxu0 0.0
  %1308 = vmatpush2.msra.mxu0 0.0
  %1309 = vmatprep.subr.mxu0 0.0
  %1310 = vmatpush2.msra.mxu0 0.0
  %1311 = vmatprep.subr.mxu0 0.0
  %1312 = vmatpush2.msra.mxu0 0.0
  %1313 = vmatprep.subr.mxu0 0.0
  %1314 = vmatpush2.msra.mxu0 0.0
  %1315 = vmatprep.subr.mxu0 0.0
  %1316 = vmatpush2.msra.mxu0 0.0
  %1317 = vmatprep.subr.mxu0 0.0
  %1318 = vmatpush2.msra.mxu0 0.0
  %1319 = vmatprep.subr.mxu0 0.0
  %1320 = vmatpush2.msra.mxu0 0.0
  %1321 = vmatprep.subr.mxu0 0.0
  %1322 = vmatpush2.msra.mxu0 0.0
  %1323 = vmatprep.subr.mxu0 0.0
  %1324 = vmatpush2.msra.mxu0 0.0
  %1325 = vmatprep.subr.mxu0 0.0
  %1326 = vmatpush2.msra.mxu0 0.0
  %1327 = vmatprep.mubr.f32.mxu0 0.0
  %1328 = vmatmul.mubr.f32.gmra.mxu0 %v1261
  %v1329 = vpop.f32.mrf.mxu0
  %v1330 = vadd.f32 0.0, %v1329
  %v1331 = vpop.f32.mrf.mxu0
  %1332 = vdwg.mxu0
  %v1333 = vadd.f32 %v1130, %v1330
  %v1334 = vxor.u32 %v1333, 2147483648
  %v1335 = vmul.f32 %v1334, 1.442695
  %v1336 = vpow.pop %v1335
  %v1337 = vadd.f32 %v1336, 1.0
  %v1338 = vrcp.pop %v1337
  %v1339 = vmul.f32 1.0, %v1338
  %v1340 = vtanh.pop %v1333
  %v1341 = vmul.f32 %v1339, %v1251
  %1343 = vrot.lane.b32.xlu0 %v1340, 64
  %v1344 = vpop.permute.xlu0 %1343
  %v1346 = vmul.f32 %v1339, %v1344
  %1348 = vrot.lane.b32.xlu0 %v1346, 32
  %v1349 = vpop.permute.xlu0 %1348
  %v1351 = vadd.f32 %v1341, %v1349
  %v1352 = vtanh.pop %v1351
  %1354 = vrot.lane.b32.xlu0 %v1352, 64
  %v1355 = vpop.permute.xlu0 %1354
  %v1357 = vmul.f32 %v1339, %v1355
  %1359 = vrot.lane.b32.xlu0 %v1357, 32
  %v1360 = vpop.permute.xlu0 %1359
  %v1361 = vsel %vm51, %v1360, 0
  %1363 = vmatprep.subr.mxu0 0.0
  %1364 = vmatpush1.msra.mxu0 0.0
  %1365 = vmatprep.subr.mxu0 0.0
  %1366 = vmatpush1.msra.mxu0 0.0
  %1367 = vmatprep.subr.mxu0 0.0
  %1368 = vmatpush1.msra.mxu0 0.0
  %1369 = vmatprep.subr.mxu0 0.0
  %1370 = vmatpush1.msra.mxu0 0.0
  %1371 = vmatprep.subr.mxu0 0.0
  %1372 = vmatpush1.msra.mxu0 0.0
  %1373 = vmatprep.subr.mxu0 0.0
  %1374 = vmatpush1.msra.mxu0 0.0
  %1375 = vmatprep.subr.mxu0 0.0
  %1376 = vmatpush1.msra.mxu0 0.0
  %1377 = vmatprep.subr.mxu0 0.0
  %1378 = vmatpush1.msra.mxu0 0.0
  %1379 = vmatprep.subr.mxu0 0.0
  %1380 = vmatpush1.msra.mxu0 0.0
  %1381 = vmatprep.subr.mxu0 0.0
  %1382 = vmatpush1.msra.mxu0 0.0
  %1383 = vmatprep.subr.mxu0 0.0
  %1384 = vmatpush1.msra.mxu0 0.0
  %1385 = vmatprep.subr.mxu0 0.0
  %1386 = vmatpush1.msra.mxu0 0.0
  %1387 = vmatprep.subr.mxu0 0.0
  %1388 = vmatpush1.msra.mxu0 %v1018
  %1389 = vmatprep.subr.mxu0 0.0
  %1390 = vmatpush1.msra.mxu0 %v1017
  %1391 = vmatprep.subr.mxu0 0.0
  %1392 = vmatpush1.msra.mxu0 %v1016
  %1393 = vmatprep.subr.mxu0 0.0
  %1394 = vmatpush1.msra.mxu0 %v1015
  %1395 = vmatprep.subr.mxu0 0.0
  %1396 = vmatpush2.msra.mxu0 0.0
  %1397 = vmatprep.subr.mxu0 0.0
  %1398 = vmatpush2.msra.mxu0 0.0
  %1399 = vmatprep.subr.mxu0 0.0
  %1400 = vmatpush2.msra.mxu0 0.0
  %1401 = vmatprep.subr.mxu0 0.0
  %1402 = vmatpush2.msra.mxu0 0.0
  %1403 = vmatprep.subr.mxu0 0.0
  %1404 = vmatpush2.msra.mxu0 0.0
  %1405 = vmatprep.subr.mxu0 0.0
  %1406 = vmatpush2.msra.mxu0 0.0
  %1407 = vmatprep.subr.mxu0 0.0
  %1408 = vmatpush2.msra.mxu0 0.0
  %1409 = vmatprep.subr.mxu0 0.0
  %1410 = vmatpush2.msra.mxu0 0.0
  %1411 = vmatprep.subr.mxu0 0.0
  %1412 = vmatpush2.msra.mxu0 0.0
  %1413 = vmatprep.subr.mxu0 0.0
  %1414 = vmatpush2.msra.mxu0 0.0
  %1415 = vmatprep.subr.mxu0 0.0
  %1416 = vmatpush2.msra.mxu0 0.0
  %1417 = vmatprep.subr.mxu0 0.0
  %1418 = vmatpush2.msra.mxu0 0.0
  %1419 = vmatprep.subr.mxu0 0.0
  %1420 = vmatpush2.msra.mxu0 0.0
  %1421 = vmatprep.subr.mxu0 0.0
  %1422 = vmatpush2.msra.mxu0 0.0
  %1423 = vmatprep.subr.mxu0 0.0
  %1424 = vmatpush2.msra.mxu0 0.0
  %1425 = vmatprep.subr.mxu0 0.0
  %1426 = vmatpush2.msra.mxu0 0.0
  %1427 = vmatprep.mubr.f32.mxu0 0.0
  %1428 = vmatmul.mubr.f32.gmra.mxu0 %v1361
  %v1429 = vpop.f32.mrf.mxu0
  %v1430 = vadd.f32 0.0, %v1429
  %v1431 = vpop.f32.mrf.mxu0
  %1432 = vdwg.mxu0
  %v1433 = vadd.f32 %v1135, %v1430
  %v1434 = vxor.u32 %v1433, 2147483648
  %v1435 = vmul.f32 %v1434, 1.442695
  %v1436 = vpow.pop %v1435
  %v1437 = vadd.f32 %v1436, 1.0
  %v1438 = vrcp.pop %v1437
  %v1439 = vmul.f32 1.0, %v1438
  %v1440 = vtanh.pop %v1433
  %v1441 = vmul.f32 %v1439, %v1351
  %1443 = vrot.lane.b32.xlu0 %v1440, 64
  %v1444 = vpop.permute.xlu0 %1443
  %v1446 = vmul.f32 %v1439, %v1444
  %1448 = vrot.lane.b32.xlu0 %v1446, 32
  %v1449 = vpop.permute.xlu0 %1448
  %v1451 = vadd.f32 %v1441, %v1449
  %v1452 = vtanh.pop %v1451
  %1454 = vrot.lane.b32.xlu0 %v1452, 64
  %v1455 = vpop.permute.xlu0 %1454
  %v1457 = vmul.f32 %v1439, %v1455
  %1459 = vrot.lane.b32.xlu0 %v1457, 32
  %v1460 = vpop.permute.xlu0 %1459
  %v1461 = vsel %vm51, %v1460, 0
  %1463 = vmatprep.subr.mxu0 0.0
  %1464 = vmatpush1.msra.mxu0 0.0
  %1465 = vmatprep.subr.mxu0 0.0
  %1466 = vmatpush1.msra.mxu0 0.0
  %1467 = vmatprep.subr.mxu0 0.0
  %1468 = vmatpush1.msra.mxu0 0.0
  %1469 = vmatprep.subr.mxu0 0.0
  %1470 = vmatpush1.msra.mxu0 0.0
  %1471 = vmatprep.subr.mxu0 0.0
  %1472 = vmatpush1.msra.mxu0 0.0
  %1473 = vmatprep.subr.mxu0 0.0
  %1474 = vmatpush1.msra.mxu0 0.0
  %1475 = vmatprep.subr.mxu0 0.0
  %1476 = vmatpush1.msra.mxu0 0.0
  %1477 = vmatprep.subr.mxu0 0.0
  %1478 = vmatpush1.msra.mxu0 0.0
  %1479 = vmatprep.subr.mxu0 0.0
  %1480 = vmatpush1.msra.mxu0 0.0
  %1481 = vmatprep.subr.mxu0 0.0
  %1482 = vmatpush1.msra.mxu0 0.0
  %1483 = vmatprep.subr.mxu0 0.0
  %1484 = vmatpush1.msra.mxu0 0.0
  %1485 = vmatprep.subr.mxu0 0.0
  %1486 = vmatpush1.msra.mxu0 0.0
  %1487 = vmatprep.subr.mxu0 0.0
  %1488 = vmatpush1.msra.mxu0 %v1018
  %1489 = vmatprep.subr.mxu0 0.0
  %1490 = vmatpush1.msra.mxu0 %v1017
  %1491 = vmatprep.subr.mxu0 0.0
  %1492 = vmatpush1.msra.mxu0 %v1016
  %1493 = vmatprep.subr.mxu0 0.0
  %1494 = vmatpush1.msra.mxu0 %v1015
  %1495 = vmatprep.subr.mxu0 0.0
  %1496 = vmatpush2.msra.mxu0 0.0
  %1497 = vmatprep.subr.mxu0 0.0
  %1498 = vmatpush2.msra.mxu0 0.0
  %1499 = vmatprep.subr.mxu0 0.0
  %1500 = vmatpush2.msra.mxu0 0.0
  %1501 = vmatprep.subr.mxu0 0.0
  %1502 = vmatpush2.msra.mxu0 0.0
  %1503 = vmatprep.subr.mxu0 0.0
  %1504 = vmatpush2.msra.mxu0 0.0
  %1505 = vmatprep.subr.mxu0 0.0
  %1506 = vmatpush2.msra.mxu0 0.0
  %1507 = vmatprep.subr.mxu0 0.0
  %1508 = vmatpush2.msra.mxu0 0.0
  %1509 = vmatprep.subr.mxu0 0.0
  %1510 = vmatpush2.msra.mxu0 0.0
  %1511 = vmatprep.subr.mxu0 0.0
  %1512 = vmatpush2.msra.mxu0 0.0
  %1513 = vmatprep.subr.mxu0 0.0
  %1514 = vmatpush2.msra.mxu0 0.0
  %1515 = vmatprep.subr.mxu0 0.0
  %1516 = vmatpush2.msra.mxu0 0.0
  %1517 = vmatprep.subr.mxu0 0.0
  %1518 = vmatpush2.msra.mxu0 0.0
  %1519 = vmatprep.subr.mxu0 0.0
  %1520 = vmatpush2.msra.mxu0 0.0
  %1521 = vmatprep.subr.mxu0 0.0
  %1522 = vmatpush2.msra.mxu0 0.0
  %1523 = vmatprep.subr.mxu0 0.0
  %1524 = vmatpush2.msra.mxu0 0.0
  %1525 = vmatprep.subr.mxu0 0.0
  %1526 = vmatpush2.msra.mxu0 0.0
  %1527 = vmatprep.mubr.f32.mxu0 0.0
  %1528 = vmatmul.mubr.f32.gmra.mxu0 %v1461
  %v1529 = vpop.f32.mrf.mxu0
  %v1530 = vadd.f32 0.0, %v1529
  %v1531 = vpop.f32.mrf.mxu0
  %1532 = vdwg.mxu0
  %v1533 = vadd.f32 %v1140, %v1530
  %v1534 = vxor.u32 %v1533, 2147483648
  %v1535 = vmul.f32 %v1534, 1.442695
  %v1536 = vpow.pop %v1535
  %v1537 = vadd.f32 %v1536, 1.0
  %v1538 = vrcp.pop %v1537
  %v1539 = vmul.f32 1.0, %v1538
  %v1540 = vtanh.pop %v1533
  %v1541 = vmul.f32 %v1539, %v1451
  %1543 = vrot.lane.b32.xlu0 %v1540, 64
  %v1544 = vpop.permute.xlu0 %1543
  %v1546 = vmul.f32 %v1539, %v1544
  %1548 = vrot.lane.b32.xlu0 %v1546, 32
  %v1549 = vpop.permute.xlu0 %1548
  %v1551 = vadd.f32 %v1541, %v1549
  %v1552 = vtanh.pop %v1551
  %1554 = vrot.lane.b32.xlu0 %v1552, 64
  %v1555 = vpop.permute.xlu0 %1554
  %v1557 = vmul.f32 %v1539, %v1555
  %1559 = vrot.lane.b32.xlu0 %v1557, 32
  %v1560 = vpop.permute.xlu0 %1559
  %v1561 = vsel %vm51, %v1560, 0
  %1563 = vmatprep.subr.mxu0 0.0
  %1564 = vmatpush1.msra.mxu0 0.0
  %1565 = vmatprep.subr.mxu0 0.0
  %1566 = vmatpush1.msra.mxu0 0.0
  %1567 = vmatprep.subr.mxu0 0.0
  %1568 = vmatpush1.msra.mxu0 0.0
  %1569 = vmatprep.subr.mxu0 0.0
  %1570 = vmatpush1.msra.mxu0 0.0
  %1571 = vmatprep.subr.mxu0 0.0
  %1572 = vmatpush1.msra.mxu0 0.0
  %1573 = vmatprep.subr.mxu0 0.0
  %1574 = vmatpush1.msra.mxu0 0.0
  %1575 = vmatprep.subr.mxu0 0.0
  %1576 = vmatpush1.msra.mxu0 0.0
  %1577 = vmatprep.subr.mxu0 0.0
  %1578 = vmatpush1.msra.mxu0 0.0
  %1579 = vmatprep.subr.mxu0 0.0
  %1580 = vmatpush1.msra.mxu0 0.0
  %1581 = vmatprep.subr.mxu0 0.0
  %1582 = vmatpush1.msra.mxu0 0.0
  %1583 = vmatprep.subr.mxu0 0.0
  %1584 = vmatpush1.msra.mxu0 0.0
  %1585 = vmatprep.subr.mxu0 0.0
  %1586 = vmatpush1.msra.mxu0 0.0
  %1587 = vmatprep.subr.mxu0 0.0
  %1588 = vmatpush1.msra.mxu0 %v1018
  %1589 = vmatprep.subr.mxu0 0.0
  %1590 = vmatpush1.msra.mxu0 %v1017
  %1591 = vmatprep.subr.mxu0 0.0
  %1592 = vmatpush1.msra.mxu0 %v1016
  %1593 = vmatprep.subr.mxu0 0.0
  %1594 = vmatpush1.msra.mxu0 %v1015
  %1595 = vmatprep.subr.mxu0 0.0
  %1596 = vmatpush2.msra.mxu0 0.0
  %1597 = vmatprep.subr.mxu0 0.0
  %1598 = vmatpush2.msra.mxu0 0.0
  %1599 = vmatprep.subr.mxu0 0.0
  %1600 = vmatpush2.msra.mxu0 0.0
  %1601 = vmatprep.subr.mxu0 0.0
  %1602 = vmatpush2.msra.mxu0 0.0
  %1603 = vmatprep.subr.mxu0 0.0
  %1604 = vmatpush2.msra.mxu0 0.0
  %1605 = vmatprep.subr.mxu0 0.0
  %1606 = vmatpush2.msra.mxu0 0.0
  %1607 = vmatprep.subr.mxu0 0.0
  %1608 = vmatpush2.msra.mxu0 0.0
  %1609 = vmatprep.subr.mxu0 0.0
  %1610 = vmatpush2.msra.mxu0 0.0
  %1611 = vmatprep.subr.mxu0 0.0
  %1612 = vmatpush2.msra.mxu0 0.0
  %1613 = vmatprep.subr.mxu0 0.0
  %1614 = vmatpush2.msra.mxu0 0.0
  %1615 = vmatprep.subr.mxu0 0.0
  %1616 = vmatpush2.msra.mxu0 0.0
  %1617 = vmatprep.subr.mxu0 0.0
  %1618 = vmatpush2.msra.mxu0 0.0
  %1619 = vmatprep.subr.mxu0 0.0
  %1620 = vmatpush2.msra.mxu0 0.0
  %1621 = vmatprep.subr.mxu0 0.0
  %1622 = vmatpush2.msra.mxu0 0.0
  %1623 = vmatprep.subr.mxu0 0.0
  %1624 = vmatpush2.msra.mxu0 0.0
  %1625 = vmatprep.subr.mxu0 0.0
  %1626 = vmatpush2.msra.mxu0 0.0
  %1627 = vmatprep.mubr.f32.mxu0 0.0
  %1628 = vmatmul.mubr.f32.gmra.mxu0 %v1561
  %v1629 = vpop.f32.mrf.mxu0
  %v1630 = vadd.f32 0.0, %v1629
  %v1631 = vpop.f32.mrf.mxu0
  %1632 = vdwg.mxu0
  %v1633 = vadd.f32 %v1145, %v1630
  %v1634 = vxor.u32 %v1633, 2147483648
  %v1635 = vmul.f32 %v1634, 1.442695
  %v1636 = vpow.pop %v1635
  %v1637 = vadd.f32 %v1636, 1.0
  %v1638 = vrcp.pop %v1637
  %v1639 = vmul.f32 1.0, %v1638
  %v1640 = vtanh.pop %v1633
  %v1641 = vmul.f32 %v1639, %v1551
  %1643 = vrot.lane.b32.xlu0 %v1640, 64
  %v1644 = vpop.permute.xlu0 %1643
  %v1646 = vmul.f32 %v1639, %v1644
  %1648 = vrot.lane.b32.xlu0 %v1646, 32
  %v1649 = vpop.permute.xlu0 %1648
  %v1651 = vadd.f32 %v1641, %v1649
  %v1652 = vtanh.pop %v1651
  %1654 = vrot.lane.b32.xlu0 %v1652, 64
  %v1655 = vpop.permute.xlu0 %1654
  %v1657 = vmul.f32 %v1639, %v1655
  %1659 = vrot.lane.b32.xlu0 %v1657, 32
  %v1660 = vpop.permute.xlu0 %1659
  %v1661 = vsel %vm51, %v1660, 0
  %1663 = vmatprep.subr.mxu0 0.0
  %1664 = vmatpush1.msra.mxu0 0.0
  %1665 = vmatprep.subr.mxu0 0.0
  %1666 = vmatpush1.msra.mxu0 0.0
  %1667 = vmatprep.subr.mxu0 0.0
  %1668 = vmatpush1.msra.mxu0 0.0
  %1669 = vmatprep.subr.mxu0 0.0
  %1670 = vmatpush1.msra.mxu0 0.0
  %1671 = vmatprep.subr.mxu0 0.0
  %1672 = vmatpush1.msra.mxu0 0.0
  %1673 = vmatprep.subr.mxu0 0.0
  %1674 = vmatpush1.msra.mxu0 0.0
  %1675 = vmatprep.subr.mxu0 0.0
  %1676 = vmatpush1.msra.mxu0 0.0
  %1677 = vmatprep.subr.mxu0 0.0
  %1678 = vmatpush1.msra.mxu0 0.0
  %1679 = vmatprep.subr.mxu0 0.0
  %1680 = vmatpush1.msra.mxu0 0.0
  %1681 = vmatprep.subr.mxu0 0.0
  %1682 = vmatpush1.msra.mxu0 0.0
  %1683 = vmatprep.subr.mxu0 0.0
  %1684 = vmatpush1.msra.mxu0 0.0
  %1685 = vmatprep.subr.mxu0 0.0
  %1686 = vmatpush1.msra.mxu0 0.0
  %1687 = vmatprep.subr.mxu0 0.0
  %1688 = vmatpush1.msra.mxu0 %v1018
  %1689 = vmatprep.subr.mxu0 0.0
  %1690 = vmatpush1.msra.mxu0 %v1017
  %1691 = vmatprep.subr.mxu0 0.0
  %1692 = vmatpush1.msra.mxu0 %v1016
  %1693 = vmatprep.subr.mxu0 0.0
  %1694 = vmatpush1.msra.mxu0 %v1015
  %1695 = vmatprep.subr.mxu0 0.0
  %1696 = vmatpush2.msra.mxu0 0.0
  %1697 = vmatprep.subr.mxu0 0.0
  %1698 = vmatpush2.msra.mxu0 0.0
  %1699 = vmatprep.subr.mxu0 0.0
  %1700 = vmatpush2.msra.mxu0 0.0
  %1701 = vmatprep.subr.mxu0 0.0
  %1702 = vmatpush2.msra.mxu0 0.0
  %1703 = vmatprep.subr.mxu0 0.0
  %1704 = vmatpush2.msra.mxu0 0.0
  %1705 = vmatprep.subr.mxu0 0.0
  %1706 = vmatpush2.msra.mxu0 0.0
  %1707 = vmatprep.subr.mxu0 0.0
  %1708 = vmatpush2.msra.mxu0 0.0
  %1709 = vmatprep.subr.mxu0 0.0
  %1710 = vmatpush2.msra.mxu0 0.0
  %1711 = vmatprep.subr.mxu0 0.0
  %1712 = vmatpush2.msra.mxu0 0.0
  %1713 = vmatprep.subr.mxu0 0.0
  %1714 = vmatpush2.msra.mxu0 0.0
  %1715 = vmatprep.subr.mxu0 0.0
  %1716 = vmatpush2.msra.mxu0 0.0
  %1717 = vmatprep.subr.mxu0 0.0
  %1718 = vmatpush2.msra.mxu0 0.0
  %1719 = vmatprep.subr.mxu0 0.0
  %1720 = vmatpush2.msra.mxu0 0.0
  %1721 = vmatprep.subr.mxu0 0.0
  %1722 = vmatpush2.msra.mxu0 0.0
  %1723 = vmatprep.subr.mxu0 0.0
  %1724 = vmatpush2.msra.mxu0 0.0
  %1725 = vmatprep.subr.mxu0 0.0
  %1726 = vmatpush2.msra.mxu0 0.0
  %1727 = vmatprep.mubr.f32.mxu0 0.0
  %1728 = vmatmul.mubr.f32.gmra.mxu0 %v1661
  %v1729 = vpop.f32.mrf.mxu0
  %v1730 = vadd.f32 0.0, %v1729
  %v1731 = vpop.f32.mrf.mxu0
  %1732 = vdwg.mxu0
  %v1733 = vadd.f32 %v1150, %v1730
  %v1734 = vxor.u32 %v1733, 2147483648
  %v1735 = vmul.f32 %v1734, 1.442695
  %v1736 = vpow.pop %v1735
  %v1737 = vadd.f32 %v1736, 1.0
  %v1738 = vrcp.pop %v1737
  %v1739 = vmul.f32 1.0, %v1738
  %v1740 = vtanh.pop %v1733
  %v1741 = vmul.f32 %v1739, %v1651
  %1743 = vrot.lane.b32.xlu0 %v1740, 64
  %v1744 = vpop.permute.xlu0 %1743
  %v1746 = vmul.f32 %v1739, %v1744
  %1748 = vrot.lane.b32.xlu0 %v1746, 32
  %v1749 = vpop.permute.xlu0 %1748
  %v1751 = vadd.f32 %v1741, %v1749
  %v1752 = vtanh.pop %v1751
  %1754 = vrot.lane.b32.xlu0 %v1752, 64
  %v1755 = vpop.permute.xlu0 %1754
  %v1757 = vmul.f32 %v1739, %v1755
  %1759 = vrot.lane.b32.xlu0 %v1757, 32
  %v1760 = vpop.permute.xlu0 %1759
  %v1761 = vsel %vm51, %v1760, 0
  %1763 = vmatprep.subr.mxu0 0.0
  %1764 = vmatpush1.msra.mxu0 0.0
  %1765 = vmatprep.subr.mxu0 0.0
  %1766 = vmatpush1.msra.mxu0 0.0
  %1767 = vmatprep.subr.mxu0 0.0
  %1768 = vmatpush1.msra.mxu0 0.0
  %1769 = vmatprep.subr.mxu0 0.0
  %1770 = vmatpush1.msra.mxu0 0.0
  %1771 = vmatprep.subr.mxu0 0.0
  %1772 = vmatpush1.msra.mxu0 0.0
  %1773 = vmatprep.subr.mxu0 0.0
  %1774 = vmatpush1.msra.mxu0 0.0
  %1775 = vmatprep.subr.mxu0 0.0
  %1776 = vmatpush1.msra.mxu0 0.0
  %1777 = vmatprep.subr.mxu0 0.0
  %1778 = vmatpush1.msra.mxu0 0.0
  %1779 = vmatprep.subr.mxu0 0.0
  %1780 = vmatpush1.msra.mxu0 0.0
  %1781 = vmatprep.subr.mxu0 0.0
  %1782 = vmatpush1.msra.mxu0 0.0
  %1783 = vmatprep.subr.mxu0 0.0
  %1784 = vmatpush1.msra.mxu0 0.0
  %1785 = vmatprep.subr.mxu0 0.0
  %1786 = vmatpush1.msra.mxu0 0.0
  %1787 = vmatprep.subr.mxu0 0.0
  %1788 = vmatpush1.msra.mxu0 %v1018
  %1789 = vmatprep.subr.mxu0 0.0
  %1790 = vmatpush1.msra.mxu0 %v1017
  %1791 = vmatprep.subr.mxu0 0.0
  %1792 = vmatpush1.msra.mxu0 %v1016
  %1793 = vmatprep.subr.mxu0 0.0
  %1794 = vmatpush1.msra.mxu0 %v1015
  %1795 = vmatprep.subr.mxu0 0.0
  %1796 = vmatpush2.msra.mxu0 0.0
  %1797 = vmatprep.subr.mxu0 0.0
  %1798 = vmatpush2.msra.mxu0 0.0
  %1799 = vmatprep.subr.mxu0 0.0
  %1800 = vmatpush2.msra.mxu0 0.0
  %1801 = vmatprep.subr.mxu0 0.0
  %1802 = vmatpush2.msra.mxu0 0.0
  %1803 = vmatprep.subr.mxu0 0.0
  %1804 = vmatpush2.msra.mxu0 0.0
  %1805 = vmatprep.subr.mxu0 0.0
  %1806 = vmatpush2.msra.mxu0 0.0
  %1807 = vmatprep.subr.mxu0 0.0
  %1808 = vmatpush2.msra.mxu0 0.0
  %1809 = vmatprep.subr.mxu0 0.0
  %1810 = vmatpush2.msra.mxu0 0.0
  %1811 = vmatprep.subr.mxu0 0.0
  %1812 = vmatpush2.msra.mxu0 0.0
  %1813 = vmatprep.subr.mxu0 0.0
  %1814 = vmatpush2.msra.mxu0 0.0
  %1815 = vmatprep.subr.mxu0 0.0
  %1816 = vmatpush2.msra.mxu0 0.0
  %1817 = vmatprep.subr.mxu0 0.0
  %1818 = vmatpush2.msra.mxu0 0.0
  %1819 = vmatprep.subr.mxu0 0.0
  %1820 = vmatpush2.msra.mxu0 0.0
  %1821 = vmatprep.subr.mxu0 0.0
  %1822 = vmatpush2.msra.mxu0 0.0
  %1823 = vmatprep.subr.mxu0 0.0
  %1824 = vmatpush2.msra.mxu0 0.0
  %1825 = vmatprep.subr.mxu0 0.0
  %1826 = vmatpush2.msra.mxu0 0.0
  %1827 = vmatprep.mubr.f32.mxu0 0.0
  %1828 = vmatmul.mubr.f32.gmra.mxu0 %v1761
  %v1829 = vpop.f32.mrf.mxu0
  %v1830 = vadd.f32 0.0, %v1829
  %v1831 = vpop.f32.mrf.mxu0
  %1832 = vdwg.mxu0
  %v1833 = vadd.f32 %v1155, %v1830
  %v1834 = vxor.u32 %v1833, 2147483648
  %v1835 = vmul.f32 %v1834, 1.442695
  %v1836 = vpow.pop %v1835
  %v1837 = vadd.f32 %v1836, 1.0
  %v1838 = vrcp.pop %v1837
  %v1839 = vmul.f32 1.0, %v1838
  %v1840 = vtanh.pop %v1833
  %v1841 = vmul.f32 %v1839, %v1751
  %1843 = vrot.lane.b32.xlu0 %v1840, 64
  %v1844 = vpop.permute.xlu0 %1843
  %v1846 = vmul.f32 %v1839, %v1844
  %1848 = vrot.lane.b32.xlu0 %v1846, 32
  %v1849 = vpop.permute.xlu0 %1848
  %v1851 = vadd.f32 %v1841, %v1849
  %v1852 = vtanh.pop %v1851
  %1854 = vrot.lane.b32.xlu0 %v1852, 64
  %v1855 = vpop.permute.xlu0 %1854
  %v1857 = vmul.f32 %v1839, %v1855
  %1859 = vrot.lane.b32.xlu0 %v1857, 32
  %v1860 = vpop.permute.xlu0 %1859
  %v1861 = vsel %vm51, %v1860, 0
  %1863 = vmatprep.subr.mxu0 0.0
  %1864 = vmatpush1.msra.mxu0 0.0
  %1865 = vmatprep.subr.mxu0 0.0
  %1866 = vmatpush1.msra.mxu0 0.0
  %1867 = vmatprep.subr.mxu0 0.0
  %1868 = vmatpush1.msra.mxu0 0.0
  %1869 = vmatprep.subr.mxu0 0.0
  %1870 = vmatpush1.msra.mxu0 0.0
  %1871 = vmatprep.subr.mxu0 0.0
  %1872 = vmatpush1.msra.mxu0 0.0
  %1873 = vmatprep.subr.mxu0 0.0
  %1874 = vmatpush1.msra.mxu0 0.0
  %1875 = vmatprep.subr.mxu0 0.0
  %1876 = vmatpush1.msra.mxu0 0.0
  %1877 = vmatprep.subr.mxu0 0.0
  %1878 = vmatpush1.msra.mxu0 0.0
  %1879 = vmatprep.subr.mxu0 0.0
  %1880 = vmatpush1.msra.mxu0 0.0
  %1881 = vmatprep.subr.mxu0 0.0
  %1882 = vmatpush1.msra.mxu0 0.0
  %1883 = vmatprep.subr.mxu0 0.0
  %1884 = vmatpush1.msra.mxu0 0.0
  %1885 = vmatprep.subr.mxu0 0.0
  %1886 = vmatpush1.msra.mxu0 0.0
  %1887 = vmatprep.subr.mxu0 0.0
  %1888 = vmatpush1.msra.mxu0 %v1018
  %1889 = vmatprep.subr.mxu0 0.0
  %1890 = vmatpush1.msra.mxu0 %v1017
  %1891 = vmatprep.subr.mxu0 0.0
  %1892 = vmatpush1.msra.mxu0 %v1016
  %1893 = vmatprep.subr.mxu0 0.0
  %1894 = vmatpush1.msra.mxu0 %v1015
  %1895 = vmatprep.subr.mxu0 0.0
  %1896 = vmatpush2.msra.mxu0 0.0
  %1897 = vmatprep.subr.mxu0 0.0
  %1898 = vmatpush2.msra.mxu0 0.0
  %1899 = vmatprep.subr.mxu0 0.0
  %1900 = vmatpush2.msra.mxu0 0.0
  %1901 = vmatprep.subr.mxu0 0.0
  %1902 = vmatpush2.msra.mxu0 0.0
  %1903 = vmatprep.subr.mxu0 0.0
  %1904 = vmatpush2.msra.mxu0 0.0
  %1905 = vmatprep.subr.mxu0 0.0
  %1906 = vmatpush2.msra.mxu0 0.0
  %1907 = vmatprep.subr.mxu0 0.0
  %1908 = vmatpush2.msra.mxu0 0.0
  %1909 = vmatprep.subr.mxu0 0.0
  %1910 = vmatpush2.msra.mxu0 0.0
  %1911 = vmatprep.subr.mxu0 0.0
  %1912 = vmatpush2.msra.mxu0 0.0
  %1913 = vmatprep.subr.mxu0 0.0
  %1914 = vmatpush2.msra.mxu0 0.0
  %1915 = vmatprep.subr.mxu0 0.0
  %1916 = vmatpush2.msra.mxu0 0.0
  %1917 = vmatprep.subr.mxu0 0.0
  %1918 = vmatpush2.msra.mxu0 0.0
  %1919 = vmatprep.subr.mxu0 0.0
  %1920 = vmatpush2.msra.mxu0 0.0
  %1921 = vmatprep.subr.mxu0 0.0
  %1922 = vmatpush2.msra.mxu0 0.0
  %1923 = vmatprep.subr.mxu0 0.0
  %1924 = vmatpush2.msra.mxu0 0.0
  %1925 = vmatprep.subr.mxu0 0.0
  %1926 = vmatpush2.msra.mxu0 0.0
  %1927 = vmatprep.mubr.f32.mxu0 0.0
  %1928 = vmatmul.mubr.f32.gmra.mxu0 %v1861
  %v1929 = vpop.f32.mrf.mxu0
  %v1930 = vadd.f32 0.0, %v1929
  %v1931 = vpop.f32.mrf.mxu0
  %1932 = vdwg.mxu0
  %v1933 = vadd.f32 %v1160, %v1930
  %v1934 = vxor.u32 %v1933, 2147483648
  %v1935 = vmul.f32 %v1934, 1.442695
  %v1936 = vpow.pop %v1935
  %v1937 = vadd.f32 %v1936, 1.0
  %v1938 = vrcp.pop %v1937
  %v1939 = vmul.f32 1.0, %v1938
  %v1940 = vtanh.pop %v1933
  %v1941 = vmul.f32 %v1939, %v1851
  %1943 = vrot.lane.b32.xlu0 %v1940, 64
  %v1944 = vpop.permute.xlu0 %1943
  %v1946 = vmul.f32 %v1939, %v1944
  %1948 = vrot.lane.b32.xlu0 %v1946, 32
  %v1949 = vpop.permute.xlu0 %1948
  %v1951 = vadd.f32 %v1941, %v1949
  %v1952 = vtanh.pop %v1951
  %1954 = vrot.lane.b32.xlu0 %v1952, 64
  %v1955 = vpop.permute.xlu0 %1954
  %v1957 = vmul.f32 %v1939, %v1955
  %1959 = vrot.lane.b32.xlu0 %v1957, 32
  %v1960 = vpop.permute.xlu0 %1959
  %s1962 = scalar_lea.vmem %s7, 8
  %1963 = vst.msk [vmem:[%s1962] sm:$0xff] %vm51, %v1960
  %1965 = vrot.lane.b32.xlu0 %v1951, 96
  %v1966 = vpop.permute.xlu0 %1965
  %s1968 = scalar_lea.vmem %s8, 8
  %1969 = vst.msk [vmem:[%s1968] sm:$0xff] %vm51, %v1966
  // Predicated region
  $region30: #{encoder_forward.1} parent=0 // pred_check
    _
  $region31: #{encoder_forward.1} parent=0 // pred_check_branch
    %1971 = sbr.rel (0) target = $region33
  $region32: #{encoder_forward.1} parent=0 // pred_region
    _
  $region33: #{encoder_forward.1} parent=0 // pred_fallthru
    _
  // Predicated region
  $region34: #{encoder_forward.1} parent=0 // pred_check
    _
  $region35: #{encoder_forward.1} parent=0 // pred_check_branch
    %1973 = sbr.rel (0) target = $region37
  $region36: #{encoder_forward.1} parent=0 // pred_region
    _
  $region37: #{encoder_forward.1} parent=0 // pred_fallthru
    _
  // Predicated region
  $region38: #{encoder_forward.1} parent=0 // pred_check
    _
  $region39: #{encoder_forward.1} parent=0 // pred_check_branch
    %1975 = sbr.rel (0) target = $region41
  $region40: #{encoder_forward.1} parent=0 // pred_region
    _
  $region41: #{encoder_forward.1} parent=0 // pred_fallthru
    _
  // Predicated region
  $region42: #{encoder_forward.1} parent=0 // pred_check
    _
  $region43: #{encoder_forward.1} parent=0 // pred_check_branch
    %1977 = sbr.rel (0) target = $region45
  $region44: #{encoder_forward.1} parent=0 // pred_region
    _
  $region45: #{encoder_forward.1} parent=0 // pred_fallthru
    _

</llo_original>
